<compile_context>
chip_gen: v7x
topology: tpu7x:2x2x1
jax: 0.10.0
libtpu: 0.0.40
codegen_flags: <defaults>
</compile_context>

<pallas_src>
import functools

import numpy as np
import jax
import jax.numpy as jnp
from jax.experimental import pallas as pl
from jax.experimental.pallas import tpu as pltpu


def _resblock_kernel(x_ref, m_ref, w1_ref, b1_ref, w2_ref, b2_ref, wsc_ref,
                     o_ref, *, k, W, mm_dtype):
    """One lane-stacked slab of TN images per grid step.

    x_ref  : (Cin, L)          L = TN * H*W, images stacked along lanes
    m_ref  : (k*k, Cin, L)     constant boundary masks (f32, pre-broadcast)
    w1_ref : (k*k, Cin, Cin)   conv1 per-tap weights (BN1 folded)
    b1_ref : (Cin, 1)          conv1 + BN1 folded bias (f32)
    w2_ref : (k*k, Cout, Cin)  conv2 per-tap weights (BN2 folded)
    b2_ref : (Cout, 1)         conv2 + BN2 folded bias + shortcut bias (f32)
    wsc_ref: (Cout, Cin)       1x1 shortcut weights (identity if no conv)
    o_ref  : (Cout, L)
    """
    pad = k // 2
    L = x_ref.shape[-1]
    offsets = [dy * W + dx
               for dy in range(-pad, pad + 1) for dx in range(-pad, pad + 1)]

    x = x_ref[...]                                            # (Cin, L) f32

    def conv(img, w_ref):
        """sum_t W_t @ (roll(img, tap t) * mask_t): k*k tiny MXU matmuls."""
        img_mm = img.astype(mm_dtype)
        acc = None
        for t, off in enumerate(offsets):
            if off == 0:
                tap = img_mm                                  # center tap: no roll/mask
            else:
                shifted = pltpu.roll(img, shift=(-off) % L, axis=1)   # XLU
                tap = (shifted * m_ref[t]).astype(mm_dtype)           # VPU
            y = jnp.dot(w_ref[t], tap, preferred_element_type=jnp.float32)
            acc = y if acc is None else acc + y
        return acc

    # ---- conv_1 + folded BN1 + ReLU (all f32 elementwise) ----
    h1 = jnp.maximum(conv(x, w1_ref) + b1_ref[...], 0.0)      # (Cin, L)

    # ---- conv_2 + folded BN2 + 1x1 shortcut + ReLU ----
    out = conv(h1, w2_ref)
    out = out + jnp.dot(wsc_ref[...], x.astype(mm_dtype),
                        preferred_element_type=jnp.float32)
    out = out + b2_ref[...]
    o_ref[...] = jnp.maximum(out, 0.0).astype(o_ref.dtype)


def _fold_conv_bn_taps(w_oihw, conv_b, gamma, beta, mean, var, eps):
    """Fold inference BatchNorm into per-tap conv weights and a bias.

    Returns (w_taps, bias): w_taps (k*k, Cout, Cin) in (ky, kx) tap order,
    bias (Cout, 1).
    """
    s = gamma / jnp.sqrt(var + eps)                           # (Cout,)
    w = w_oihw * s[:, None, None, None]                       # (Cout, Cin, k, k)
    Cout, Cin, k, _ = w.shape
    w_taps = jnp.transpose(w, (2, 3, 0, 1)).reshape(k * k, Cout, Cin)
    bias = (beta + (conv_b - mean) * s).reshape(-1, 1)
    return w_taps.astype(jnp.float32), bias.astype(jnp.float32)


def _boundary_masks(H, W, k, TN, Cin):
    """Constant (k*k, Cin, TN*H*W) in-bounds masks; tap order matches the kernel."""
    pad = k // 2
    P = H * W
    pos = np.arange(P)
    row, col = pos // W, pos % W
    rows = []
    for dy in range(-pad, pad + 1):
        for dx in range(-pad, pad + 1):
            ok = (row + dy >= 0) & (row + dy < H) & (col + dx >= 0) & (col + dx < W)
            rows.append(ok)
    m = np.stack(rows).astype(np.float32)                     # (k*k, P)
    m = np.tile(m, (1, TN))                                   # (k*k, TN*P): per-image
    m = np.broadcast_to(m[:, None, :], (k * k, Cin, TN * P))  # pre-broadcast (no in-kernel bcast)
    return jnp.asarray(np.ascontiguousarray(m))


def _choose_images_per_step(N, P, Cin, Cout, k):
    """Largest divisor TN of N keeping >= 2 grid steps when N >= 2 (so both v7x
    TensorCores get work) while fitting a modest VMEM budget."""
    # rough per-image VMEM: double-buffered in/out blocks + masks + live f32 values
    per_img = 4 * P * (2 * Cin + 2 * Cout + (k * k) * Cin + 4 * max(Cin, Cout))
    cap = max(1, (8 * 1024 * 1024) // per_img)
    min_steps = 2 if N >= 2 else 1
    best = 1
    for tn in range(1, N + 1):
        if N % tn == 0 and tn <= cap and N // tn >= min_steps:
            best = tn
    return best


def residual_block_2d(x_nchw, params, *, kernel_size, stride,
                      images_per_step=None, matmul_dtype=jnp.float32):
    """Wrapper: fold BN / biases / shortcut, lay images out lane-dense, launch kernel.

    On v6e/v7x, pass matmul_dtype=jnp.bfloat16 to halve MXU-input bytes
    (accumulation and all elementwise work stays f32).
    """
    assert stride == 1, "only the stride==1 configuration is implemented"
    eps = 1e-5
    N, Cin, H, W = x_nchw.shape
    k = kernel_size
    P = H * W
    Cout = params["w2"].shape[0]
    n_taps = k * k

    # ---- parameter plumbing (plain JAX glue, runs once) ----
    w1t, b1 = _fold_conv_bn_taps(params["w1"], params["b1"], params["gamma1"],
                                 params["beta1"], params["mean1"], params["var1"], eps)
    w2t, b2 = _fold_conv_bn_taps(params["w2"], params["b2"], params["gamma2"],
                                 params["beta2"], params["mean2"], params["var2"], eps)

    if params.get("wsc") is not None:                         # 1x1 conv shortcut
        wsc = params["wsc"][:, :, 0, 0].astype(jnp.float32)   # (Cout, Cin)
        b2 = b2 + params["bsc"].reshape(-1, 1).astype(jnp.float32)
    else:                                                     # identity shortcut
        assert Cin == Cout, "identity shortcut requires Cin == Cout"
        wsc = jnp.eye(Cout, dtype=jnp.float32)

    w1t = w1t.astype(matmul_dtype)
    w2t = w2t.astype(matmul_dtype)
    wsc = wsc.astype(matmul_dtype)

    if images_per_step is None:
        images_per_step = _choose_images_per_step(N, P, Cin, Cout, k)
    TN = images_per_step
    assert N % TN == 0, "images_per_step must divide the batch"
    L = TN * P                                                # lanes per grid step

    # NCHW -> (Cin, N*P): channels on sublanes, images stacked along lanes.
    # (One tiny wrapper-side transpose; everything inside the kernel is lane-dense.)
    x2 = jnp.transpose(x_nchw, (1, 0, 2, 3)).reshape(Cin, N * P).astype(jnp.float32)

    masks = _boundary_masks(H, W, k, TN, Cin)                 # constant-folded masks

    kern = functools.partial(_resblock_kernel, k=k, W=W, mm_dtype=matmul_dtype)

    out = pl.pallas_call(
        kern,
        out_shape=jax.ShapeDtypeStruct((Cout, N * P), jnp.float32),
        grid_spec=pltpu.PrefetchScalarGridSpec(
            num_scalar_prefetch=0,
            grid=(N // TN,),                                  # >= 2 steps when N >= 2
            in_specs=[
                pl.BlockSpec((Cin, L), lambda n: (0, n)),              # x slab
                pl.BlockSpec((n_taps, Cin, L), lambda n: (0, 0, 0)),   # boundary masks
                pl.BlockSpec((n_taps, Cin, Cin), lambda n: (0, 0, 0)), # conv1 taps (BN folded)
                pl.BlockSpec((Cin, 1), lambda n: (0, 0)),              # conv1 bias
                pl.BlockSpec((n_taps, Cout, Cin), lambda n: (0, 0, 0)),# conv2 taps (BN folded)
                pl.BlockSpec((Cout, 1), lambda n: (0, 0)),             # conv2 + shortcut bias
                pl.BlockSpec((Cout, Cin), lambda n: (0, 0)),           # 1x1 shortcut weight
            ],
            out_specs=pl.BlockSpec((Cout, L), lambda n: (0, n)),
        ),
        compiler_params=pltpu.CompilerParams(dimension_semantics=("parallel",)),
    )(x2, masks, w1t, b1, w2t, b2, wsc)

    # (Cout, N*P) -> NCHW
    return jnp.transpose(out.reshape(Cout, N, H, W), (1, 0, 2, 3))


def _reference_nchw(x, params, *, kernel_size, eps=1e-5):
    """Pure-JAX reference with the module's original (unfolded) formulation."""
    k = kernel_size
    pad = k // 2

    def conv(x, w, b, padding):
        y = jax.lax.conv_general_dilated(
            x, w, window_strides=(1, 1), padding=padding,
            dimension_numbers=("NCHW", "OIHW", "NCHW"))
        return y + b.reshape(1, -1, 1, 1)

    def bn(y, g, bt, m, v):
        s = g.reshape(1, -1, 1, 1) / jnp.sqrt(v.reshape(1, -1, 1, 1) + eps)
        return (y - m.reshape(1, -1, 1, 1)) * s + bt.reshape(1, -1, 1, 1)

    h = conv(x, params["w1"], params["b1"], ((pad, pad), (pad, pad)))
    h = jnp.maximum(bn(h, params["gamma1"], params["beta1"],
                       params["mean1"], params["var1"]), 0.0)
    h2 = conv(h, params["w2"], params["b2"], ((pad, pad), (pad, pad)))
    h2 = bn(h2, params["gamma2"], params["beta2"], params["mean2"], params["var2"])
    if params.get("wsc") is not None:
        sc = conv(x, params["wsc"], params["bsc"], ((0, 0), (0, 0)))
    else:
        sc = x
    return jnp.maximum(h2 + sc, 0.0)


if __name__ == "__main__":
    # module config: ResidualBlock2d(in_filters=4, out_filters=8, kernel_size=3, stride=1)
    in_filters, out_filters, kernel_size, stride = 4, 8, 3, 1
    N, H, W = 2, 16, 16

    key = jax.random.PRNGKey(0)
    ks = jax.random.split(key, 12)
    params = {
        "w1": 0.2 * jax.random.normal(ks[0], (in_filters, in_filters, kernel_size, kernel_size)),
        "b1": 0.1 * jax.random.normal(ks[1], (in_filters,)),
        "gamma1": 1.0 + 0.1 * jax.random.normal(ks[2], (in_filters,)),
        "beta1": 0.1 * jax.random.normal(ks[3], (in_filters,)),
        "mean1": 0.1 * jax.random.normal(ks[4], (in_filters,)),
        "var1": 0.5 + jax.random.uniform(ks[5], (in_filters,)),
        "w2": 0.2 * jax.random.normal(ks[6], (out_filters, in_filters, kernel_size, kernel_size)),
        "b2": 0.1 * jax.random.normal(ks[7], (out_filters,)),
        "gamma2": 1.0 + 0.1 * jax.random.normal(ks[8], (out_filters,)),
        "beta2": 0.1 * jax.random.normal(ks[9], (out_filters,)),
        "mean2": 0.1 * jax.random.normal(ks[10], (out_filters,)),
        "var2": 0.5 + jax.random.uniform(ks[11], (out_filters,)),
        # 1x1 shortcut conv (present because out_filters != in_filters)
        "wsc": 0.2 * jax.random.normal(jax.random.fold_in(key, 100),
                                       (out_filters, in_filters, 1, 1)),
        "bsc": 0.1 * jax.random.normal(jax.random.fold_in(key, 101), (out_filters,)),
    }

    x = jax.random.normal(jax.random.fold_in(key, 200), (N, in_filters, H, W), jnp.float32)

    out_nchw = residual_block_2d(x, params, kernel_size=kernel_size, stride=stride)
    out_nchw = jax.block_until_ready(out_nchw)

    ref_nchw = _reference_nchw(x, params, kernel_size=kernel_size)
    assert out_nchw.shape == (N, out_filters, H, W)
    assert jnp.allclose(out_nchw, ref_nchw, atol=2e-3, rtol=2e-3), (
        float(jnp.max(jnp.abs(out_nchw - ref_nchw))))

    print("KERNEL_OK")
</pallas_src>

<mosaic_0001>
module attributes {stable_mosaic.version = 11 : i64} {
  func.func @_resblock_kernel(%arg0: i32, %arg1: memref<4x256xf32, #tpu.memory_space<vmem>>, %arg2: memref<9x4x256xf32, #tpu.memory_space<vmem>>, %arg3: memref<9x4x4xf32, #tpu.memory_space<vmem>>, %arg4: memref<4x1xf32, #tpu.memory_space<vmem>>, %arg5: memref<9x8x4xf32, #tpu.memory_space<vmem>>, %arg6: memref<8x1xf32, #tpu.memory_space<vmem>>, %arg7: memref<8x4xf32, #tpu.memory_space<vmem>>, %arg8: memref<8x256xf32, #tpu.memory_space<vmem>>) attributes {dimension_semantics = [#tpu.dimension_semantics<parallel>], iteration_bounds = array<i64: 2>, scalar_prefetch = 0 : i64, scratch_operands = 0 : i64, tpu.core_type = #tpu.core_type<tc>, window_params = [{transform_indices = @transform_0, window_bounds = array<i64: 4, 256>}, {pipeline_mode = #tpu.pipeline_mode<synchronous>, transform_indices = @transform_1, window_bounds = array<i64: 9, 4, 256>}, {pipeline_mode = #tpu.pipeline_mode<synchronous>, transform_indices = @transform_2, window_bounds = array<i64: 9, 4, 4>}, {pipeline_mode = #tpu.pipeline_mode<synchronous>, transform_indices = @transform_3, window_bounds = array<i64: 4, 1>}, {pipeline_mode = #tpu.pipeline_mode<synchronous>, transform_indices = @transform_4, window_bounds = array<i64: 9, 8, 4>}, {pipeline_mode = #tpu.pipeline_mode<synchronous>, transform_indices = @transform_5, window_bounds = array<i64: 8, 1>}, {pipeline_mode = #tpu.pipeline_mode<synchronous>, transform_indices = @transform_6, window_bounds = array<i64: 8, 4>}, {transform_indices = @transform_7, window_bounds = array<i64: 8, 256>}]} {
    %c0 = arith.constant 0 : index
    %c0_0 = arith.constant 0 : index
    %0 = vector.load %arg1[%c0, %c0_0] : memref<4x256xf32, #tpu.memory_space<vmem>>, vector<4x256xf32>
    %c17_i32 = arith.constant 17 : i32
    %1 = tpu.dynamic_rotate %0 by %c17_i32 dim 1 : vector<4x256xf32>, i32 -> vector<4x256xf32>
    %c0_1 = arith.constant 0 : index
    %c0_2 = arith.constant 0 : index
    %c0_3 = arith.constant 0 : index
    %2 = vector.load %arg2[%c0_1, %c0_2, %c0_3] : memref<9x4x256xf32, #tpu.memory_space<vmem>>, vector<1x4x256xf32>
    %3 = vector.shape_cast %2 : vector<1x4x256xf32> to vector<4x256xf32>
    %4 = arith.mulf %1, %3 : vector<4x256xf32>
    %c0_4 = arith.constant 0 : index
    %c0_5 = arith.constant 0 : index
    %c0_6 = arith.constant 0 : index
    %5 = vector.load %arg3[%c0_4, %c0_5, %c0_6] : memref<9x4x4xf32, #tpu.memory_space<vmem>>, vector<1x4x4xf32>
    %6 = vector.shape_cast %5 : vector<1x4x4xf32> to vector<4x4xf32>
    %cst = arith.constant dense<0.000000e+00> : vector<4x256xf32>
    %7 = tpu.matmul %6, %4, %cst {dimension_numbers = #tpu.dot_dimension_numbers<[1], [0], [0], [1], [0, 0, 1, 1], [], []>} : vector<4x4xf32>, vector<4x256xf32>, vector<4x256xf32> -> vector<4x256xf32>
    %c16_i32 = arith.constant 16 : i32
    %8 = tpu.dynamic_rotate %0 by %c16_i32 dim 1 : vector<4x256xf32>, i32 -> vector<4x256xf32>
    %c1 = arith.constant 1 : index
    %c0_7 = arith.constant 0 : index
    %c0_8 = arith.constant 0 : index
    %9 = vector.load %arg2[%c1, %c0_7, %c0_8] : memref<9x4x256xf32, #tpu.memory_space<vmem>>, vector<1x4x256xf32>
    %10 = vector.shape_cast %9 : vector<1x4x256xf32> to vector<4x256xf32>
    %11 = arith.mulf %8, %10 : vector<4x256xf32>
    %c1_9 = arith.constant 1 : index
    %c0_10 = arith.constant 0 : index
    %c0_11 = arith.constant 0 : index
    %12 = vector.load %arg3[%c1_9, %c0_10, %c0_11] : memref<9x4x4xf32, #tpu.memory_space<vmem>>, vector<1x4x4xf32>
    %13 = vector.shape_cast %12 : vector<1x4x4xf32> to vector<4x4xf32>
    %cst_12 = arith.constant dense<0.000000e+00> : vector<4x256xf32>
    %14 = tpu.matmul %13, %11, %cst_12 {dimension_numbers = #tpu.dot_dimension_numbers<[1], [0], [0], [1], [0, 0, 1, 1], [], []>} : vector<4x4xf32>, vector<4x256xf32>, vector<4x256xf32> -> vector<4x256xf32>
    %15 = arith.addf %7, %14 : vector<4x256xf32>
    %c15_i32 = arith.constant 15 : i32
    %16 = tpu.dynamic_rotate %0 by %c15_i32 dim 1 : vector<4x256xf32>, i32 -> vector<4x256xf32>
    %c2 = arith.constant 2 : index
    %c0_13 = arith.constant 0 : index
    %c0_14 = arith.constant 0 : index
    %17 = vector.load %arg2[%c2, %c0_13, %c0_14] : memref<9x4x256xf32, #tpu.memory_space<vmem>>, vector<1x4x256xf32>
    %18 = vector.shape_cast %17 : vector<1x4x256xf32> to vector<4x256xf32>
    %19 = arith.mulf %16, %18 : vector<4x256xf32>
    %c2_15 = arith.constant 2 : index
    %c0_16 = arith.constant 0 : index
    %c0_17 = arith.constant 0 : index
    %20 = vector.load %arg3[%c2_15, %c0_16, %c0_17] : memref<9x4x4xf32, #tpu.memory_space<vmem>>, vector<1x4x4xf32>
    %21 = vector.shape_cast %20 : vector<1x4x4xf32> to vector<4x4xf32>
    %cst_18 = arith.constant dense<0.000000e+00> : vector<4x256xf32>
    %22 = tpu.matmul %21, %19, %cst_18 {dimension_numbers = #tpu.dot_dimension_numbers<[1], [0], [0], [1], [0, 0, 1, 1], [], []>} : vector<4x4xf32>, vector<4x256xf32>, vector<4x256xf32> -> vector<4x256xf32>
    %23 = arith.addf %15, %22 : vector<4x256xf32>
    %c1_i32 = arith.constant 1 : i32
    %24 = tpu.dynamic_rotate %0 by %c1_i32 dim 1 : vector<4x256xf32>, i32 -> vector<4x256xf32>
    %c3 = arith.constant 3 : index
    %c0_19 = arith.constant 0 : index
    %c0_20 = arith.constant 0 : index
    %25 = vector.load %arg2[%c3, %c0_19, %c0_20] : memref<9x4x256xf32, #tpu.memory_space<vmem>>, vector<1x4x256xf32>
    %26 = vector.shape_cast %25 : vector<1x4x256xf32> to vector<4x256xf32>
    %27 = arith.mulf %24, %26 : vector<4x256xf32>
    %c3_21 = arith.constant 3 : index
    %c0_22 = arith.constant 0 : index
    %c0_23 = arith.constant 0 : index
    %28 = vector.load %arg3[%c3_21, %c0_22, %c0_23] : memref<9x4x4xf32, #tpu.memory_space<vmem>>, vector<1x4x4xf32>
    %29 = vector.shape_cast %28 : vector<1x4x4xf32> to vector<4x4xf32>
    %cst_24 = arith.constant dense<0.000000e+00> : vector<4x256xf32>
    %30 = tpu.matmul %29, %27, %cst_24 {dimension_numbers = #tpu.dot_dimension_numbers<[1], [0], [0], [1], [0, 0, 1, 1], [], []>} : vector<4x4xf32>, vector<4x256xf32>, vector<4x256xf32> -> vector<4x256xf32>
    %31 = arith.addf %23, %30 : vector<4x256xf32>
    %c4 = arith.constant 4 : index
    %c0_25 = arith.constant 0 : index
    %c0_26 = arith.constant 0 : index
    %32 = vector.load %arg3[%c4, %c0_25, %c0_26] : memref<9x4x4xf32, #tpu.memory_space<vmem>>, vector<1x4x4xf32>
    %33 = vector.shape_cast %32 : vector<1x4x4xf32> to vector<4x4xf32>
    %cst_27 = arith.constant dense<0.000000e+00> : vector<4x256xf32>
    %34 = tpu.matmul %33, %0, %cst_27 {dimension_numbers = #tpu.dot_dimension_numbers<[1], [0], [0], [1], [0, 0, 1, 1], [], []>} : vector<4x4xf32>, vector<4x256xf32>, vector<4x256xf32> -> vector<4x256xf32>
    %35 = arith.addf %31, %34 : vector<4x256xf32>
    %c255_i32 = arith.constant 255 : i32
    %36 = tpu.dynamic_rotate %0 by %c255_i32 dim 1 : vector<4x256xf32>, i32 -> vector<4x256xf32>
    %c5 = arith.constant 5 : index
    %c0_28 = arith.constant 0 : index
    %c0_29 = arith.constant 0 : index
    %37 = vector.load %arg2[%c5, %c0_28, %c0_29] : memref<9x4x256xf32, #tpu.memory_space<vmem>>, vector<1x4x256xf32>
    %38 = vector.shape_cast %37 : vector<1x4x256xf32> to vector<4x256xf32>
    %39 = arith.mulf %36, %38 : vector<4x256xf32>
    %c5_30 = arith.constant 5 : index
    %c0_31 = arith.constant 0 : index
    %c0_32 = arith.constant 0 : index
    %40 = vector.load %arg3[%c5_30, %c0_31, %c0_32] : memref<9x4x4xf32, #tpu.memory_space<vmem>>, vector<1x4x4xf32>
    %41 = vector.shape_cast %40 : vector<1x4x4xf32> to vector<4x4xf32>
    %cst_33 = arith.constant dense<0.000000e+00> : vector<4x256xf32>
    %42 = tpu.matmul %41, %39, %cst_33 {dimension_numbers = #tpu.dot_dimension_numbers<[1], [0], [0], [1], [0, 0, 1, 1], [], []>} : vector<4x4xf32>, vector<4x256xf32>, vector<4x256xf32> -> vector<4x256xf32>
    %43 = arith.addf %35, %42 : vector<4x256xf32>
    %c241_i32 = arith.constant 241 : i32
    %44 = tpu.dynamic_rotate %0 by %c241_i32 dim 1 : vector<4x256xf32>, i32 -> vector<4x256xf32>
    %c6 = arith.constant 6 : index
    %c0_34 = arith.constant 0 : index
    %c0_35 = arith.constant 0 : index
    %45 = vector.load %arg2[%c6, %c0_34, %c0_35] : memref<9x4x256xf32, #tpu.memory_space<vmem>>, vector<1x4x256xf32>
    %46 = vector.shape_cast %45 : vector<1x4x256xf32> to vector<4x256xf32>
    %47 = arith.mulf %44, %46 : vector<4x256xf32>
    %c6_36 = arith.constant 6 : index
    %c0_37 = arith.constant 0 : index
    %c0_38 = arith.constant 0 : index
    %48 = vector.load %arg3[%c6_36, %c0_37, %c0_38] : memref<9x4x4xf32, #tpu.memory_space<vmem>>, vector<1x4x4xf32>
    %49 = vector.shape_cast %48 : vector<1x4x4xf32> to vector<4x4xf32>
    %cst_39 = arith.constant dense<0.000000e+00> : vector<4x256xf32>
    %50 = tpu.matmul %49, %47, %cst_39 {dimension_numbers = #tpu.dot_dimension_numbers<[1], [0], [0], [1], [0, 0, 1, 1], [], []>} : vector<4x4xf32>, vector<4x256xf32>, vector<4x256xf32> -> vector<4x256xf32>
    %51 = arith.addf %43, %50 : vector<4x256xf32>
    %c240_i32 = arith.constant 240 : i32
    %52 = tpu.dynamic_rotate %0 by %c240_i32 dim 1 : vector<4x256xf32>, i32 -> vector<4x256xf32>
    %c7 = arith.constant 7 : index
    %c0_40 = arith.constant 0 : index
    %c0_41 = arith.constant 0 : index
    %53 = vector.load %arg2[%c7, %c0_40, %c0_41] : memref<9x4x256xf32, #tpu.memory_space<vmem>>, vector<1x4x256xf32>
    %54 = vector.shape_cast %53 : vector<1x4x256xf32> to vector<4x256xf32>
    %55 = arith.mulf %52, %54 : vector<4x256xf32>
    %c7_42 = arith.constant 7 : index
    %c0_43 = arith.constant 0 : index
    %c0_44 = arith.constant 0 : index
    %56 = vector.load %arg3[%c7_42, %c0_43, %c0_44] : memref<9x4x4xf32, #tpu.memory_space<vmem>>, vector<1x4x4xf32>
    %57 = vector.shape_cast %56 : vector<1x4x4xf32> to vector<4x4xf32>
    %cst_45 = arith.constant dense<0.000000e+00> : vector<4x256xf32>
    %58 = tpu.matmul %57, %55, %cst_45 {dimension_numbers = #tpu.dot_dimension_numbers<[1], [0], [0], [1], [0, 0, 1, 1], [], []>} : vector<4x4xf32>, vector<4x256xf32>, vector<4x256xf32> -> vector<4x256xf32>
    %59 = arith.addf %51, %58 : vector<4x256xf32>
    %c239_i32 = arith.constant 239 : i32
    %60 = tpu.dynamic_rotate %0 by %c239_i32 dim 1 : vector<4x256xf32>, i32 -> vector<4x256xf32>
    %c8 = arith.constant 8 : index
    %c0_46 = arith.constant 0 : index
    %c0_47 = arith.constant 0 : index
    %61 = vector.load %arg2[%c8, %c0_46, %c0_47] : memref<9x4x256xf32, #tpu.memory_space<vmem>>, vector<1x4x256xf32>
    %62 = vector.shape_cast %61 : vector<1x4x256xf32> to vector<4x256xf32>
    %63 = arith.mulf %60, %62 : vector<4x256xf32>
    %c8_48 = arith.constant 8 : index
    %c0_49 = arith.constant 0 : index
    %c0_50 = arith.constant 0 : index
    %64 = vector.load %arg3[%c8_48, %c0_49, %c0_50] : memref<9x4x4xf32, #tpu.memory_space<vmem>>, vector<1x4x4xf32>
    %65 = vector.shape_cast %64 : vector<1x4x4xf32> to vector<4x4xf32>
    %cst_51 = arith.constant dense<0.000000e+00> : vector<4x256xf32>
    %66 = tpu.matmul %65, %63, %cst_51 {dimension_numbers = #tpu.dot_dimension_numbers<[1], [0], [0], [1], [0, 0, 1, 1], [], []>} : vector<4x4xf32>, vector<4x256xf32>, vector<4x256xf32> -> vector<4x256xf32>
    %67 = arith.addf %59, %66 : vector<4x256xf32>
    %c0_52 = arith.constant 0 : index
    %c0_53 = arith.constant 0 : index
    %68 = vector.load %arg4[%c0_52, %c0_53] : memref<4x1xf32, #tpu.memory_space<vmem>>, vector<4x1xf32>
    %69 = vector.broadcast %68 : vector<4x1xf32> to vector<4x256xf32>
    %70 = arith.addf %67, %69 : vector<4x256xf32>
    %cst_54 = arith.constant 0.000000e+00 : f32
    %71 = vector.broadcast %cst_54 : f32 to vector<4x256xf32>
    %72 = arith.maximumf %70, %71 : vector<4x256xf32>
    %c17_i32_55 = arith.constant 17 : i32
    %73 = tpu.dynamic_rotate %72 by %c17_i32_55 dim 1 : vector<4x256xf32>, i32 -> vector<4x256xf32>
    %c0_56 = arith.constant 0 : index
    %c0_57 = arith.constant 0 : index
    %c0_58 = arith.constant 0 : index
    %74 = vector.load %arg2[%c0_56, %c0_57, %c0_58] : memref<9x4x256xf32, #tpu.memory_space<vmem>>, vector<1x4x256xf32>
    %75 = vector.shape_cast %74 : vector<1x4x256xf32> to vector<4x256xf32>
    %76 = arith.mulf %73, %75 : vector<4x256xf32>
    %c0_59 = arith.constant 0 : index
    %c0_60 = arith.constant 0 : index
    %c0_61 = arith.constant 0 : index
    %77 = vector.load %arg5[%c0_59, %c0_60, %c0_61] : memref<9x8x4xf32, #tpu.memory_space<vmem>>, vector<1x8x4xf32>
    %78 = vector.shape_cast %77 : vector<1x8x4xf32> to vector<8x4xf32>
    %cst_62 = arith.constant dense<0.000000e+00> : vector<8x256xf32>
    %79 = tpu.matmul %78, %76, %cst_62 {dimension_numbers = #tpu.dot_dimension_numbers<[1], [0], [0], [1], [0, 0, 1, 1], [], []>} : vector<8x4xf32>, vector<4x256xf32>, vector<8x256xf32> -> vector<8x256xf32>
    %c16_i32_63 = arith.constant 16 : i32
    %80 = tpu.dynamic_rotate %72 by %c16_i32_63 dim 1 : vector<4x256xf32>, i32 -> vector<4x256xf32>
    %c1_64 = arith.constant 1 : index
    %c0_65 = arith.constant 0 : index
    %c0_66 = arith.constant 0 : index
    %81 = vector.load %arg2[%c1_64, %c0_65, %c0_66] : memref<9x4x256xf32, #tpu.memory_space<vmem>>, vector<1x4x256xf32>
    %82 = vector.shape_cast %81 : vector<1x4x256xf32> to vector<4x256xf32>
    %83 = arith.mulf %80, %82 : vector<4x256xf32>
    %c1_67 = arith.constant 1 : index
    %c0_68 = arith.constant 0 : index
    %c0_69 = arith.constant 0 : index
    %84 = vector.load %arg5[%c1_67, %c0_68, %c0_69] : memref<9x8x4xf32, #tpu.memory_space<vmem>>, vector<1x8x4xf32>
    %85 = vector.shape_cast %84 : vector<1x8x4xf32> to vector<8x4xf32>
    %cst_70 = arith.constant dense<0.000000e+00> : vector<8x256xf32>
    %86 = tpu.matmul %85, %83, %cst_70 {dimension_numbers = #tpu.dot_dimension_numbers<[1], [0], [0], [1], [0, 0, 1, 1], [], []>} : vector<8x4xf32>, vector<4x256xf32>, vector<8x256xf32> -> vector<8x256xf32>
    %87 = arith.addf %79, %86 : vector<8x256xf32>
    %c15_i32_71 = arith.constant 15 : i32
    %88 = tpu.dynamic_rotate %72 by %c15_i32_71 dim 1 : vector<4x256xf32>, i32 -> vector<4x256xf32>
    %c2_72 = arith.constant 2 : index
    %c0_73 = arith.constant 0 : index
    %c0_74 = arith.constant 0 : index
    %89 = vector.load %arg2[%c2_72, %c0_73, %c0_74] : memref<9x4x256xf32, #tpu.memory_space<vmem>>, vector<1x4x256xf32>
    %90 = vector.shape_cast %89 : vector<1x4x256xf32> to vector<4x256xf32>
    %91 = arith.mulf %88, %90 : vector<4x256xf32>
    %c2_75 = arith.constant 2 : index
    %c0_76 = arith.constant 0 : index
    %c0_77 = arith.constant 0 : index
    %92 = vector.load %arg5[%c2_75, %c0_76, %c0_77] : memref<9x8x4xf32, #tpu.memory_space<vmem>>, vector<1x8x4xf32>
    %93 = vector.shape_cast %92 : vector<1x8x4xf32> to vector<8x4xf32>
    %cst_78 = arith.constant dense<0.000000e+00> : vector<8x256xf32>
    %94 = tpu.matmul %93, %91, %cst_78 {dimension_numbers = #tpu.dot_dimension_numbers<[1], [0], [0], [1], [0, 0, 1, 1], [], []>} : vector<8x4xf32>, vector<4x256xf32>, vector<8x256xf32> -> vector<8x256xf32>
    %95 = arith.addf %87, %94 : vector<8x256xf32>
    %c1_i32_79 = arith.constant 1 : i32
    %96 = tpu.dynamic_rotate %72 by %c1_i32_79 dim 1 : vector<4x256xf32>, i32 -> vector<4x256xf32>
    %c3_80 = arith.constant 3 : index
    %c0_81 = arith.constant 0 : index
    %c0_82 = arith.constant 0 : index
    %97 = vector.load %arg2[%c3_80, %c0_81, %c0_82] : memref<9x4x256xf32, #tpu.memory_space<vmem>>, vector<1x4x256xf32>
    %98 = vector.shape_cast %97 : vector<1x4x256xf32> to vector<4x256xf32>
    %99 = arith.mulf %96, %98 : vector<4x256xf32>
    %c3_83 = arith.constant 3 : index
    %c0_84 = arith.constant 0 : index
    %c0_85 = arith.constant 0 : index
    %100 = vector.load %arg5[%c3_83, %c0_84, %c0_85] : memref<9x8x4xf32, #tpu.memory_space<vmem>>, vector<1x8x4xf32>
    %101 = vector.shape_cast %100 : vector<1x8x4xf32> to vector<8x4xf32>
    %cst_86 = arith.constant dense<0.000000e+00> : vector<8x256xf32>
    %102 = tpu.matmul %101, %99, %cst_86 {dimension_numbers = #tpu.dot_dimension_numbers<[1], [0], [0], [1], [0, 0, 1, 1], [], []>} : vector<8x4xf32>, vector<4x256xf32>, vector<8x256xf32> -> vector<8x256xf32>
    %103 = arith.addf %95, %102 : vector<8x256xf32>
    %c4_87 = arith.constant 4 : index
    %c0_88 = arith.constant 0 : index
    %c0_89 = arith.constant 0 : index
    %104 = vector.load %arg5[%c4_87, %c0_88, %c0_89] : memref<9x8x4xf32, #tpu.memory_space<vmem>>, vector<1x8x4xf32>
    %105 = vector.shape_cast %104 : vector<1x8x4xf32> to vector<8x4xf32>
    %cst_90 = arith.constant dense<0.000000e+00> : vector<8x256xf32>
    %106 = tpu.matmul %105, %72, %cst_90 {dimension_numbers = #tpu.dot_dimension_numbers<[1], [0], [0], [1], [0, 0, 1, 1], [], []>} : vector<8x4xf32>, vector<4x256xf32>, vector<8x256xf32> -> vector<8x256xf32>
    %107 = arith.addf %103, %106 : vector<8x256xf32>
    %c255_i32_91 = arith.constant 255 : i32
    %108 = tpu.dynamic_rotate %72 by %c255_i32_91 dim 1 : vector<4x256xf32>, i32 -> vector<4x256xf32>
    %c5_92 = arith.constant 5 : index
    %c0_93 = arith.constant 0 : index
    %c0_94 = arith.constant 0 : index
    %109 = vector.load %arg2[%c5_92, %c0_93, %c0_94] : memref<9x4x256xf32, #tpu.memory_space<vmem>>, vector<1x4x256xf32>
    %110 = vector.shape_cast %109 : vector<1x4x256xf32> to vector<4x256xf32>
    %111 = arith.mulf %108, %110 : vector<4x256xf32>
    %c5_95 = arith.constant 5 : index
    %c0_96 = arith.constant 0 : index
    %c0_97 = arith.constant 0 : index
    %112 = vector.load %arg5[%c5_95, %c0_96, %c0_97] : memref<9x8x4xf32, #tpu.memory_space<vmem>>, vector<1x8x4xf32>
    %113 = vector.shape_cast %112 : vector<1x8x4xf32> to vector<8x4xf32>
    %cst_98 = arith.constant dense<0.000000e+00> : vector<8x256xf32>
    %114 = tpu.matmul %113, %111, %cst_98 {dimension_numbers = #tpu.dot_dimension_numbers<[1], [0], [0], [1], [0, 0, 1, 1], [], []>} : vector<8x4xf32>, vector<4x256xf32>, vector<8x256xf32> -> vector<8x256xf32>
    %115 = arith.addf %107, %114 : vector<8x256xf32>
    %c241_i32_99 = arith.constant 241 : i32
    %116 = tpu.dynamic_rotate %72 by %c241_i32_99 dim 1 : vector<4x256xf32>, i32 -> vector<4x256xf32>
    %c6_100 = arith.constant 6 : index
    %c0_101 = arith.constant 0 : index
    %c0_102 = arith.constant 0 : index
    %117 = vector.load %arg2[%c6_100, %c0_101, %c0_102] : memref<9x4x256xf32, #tpu.memory_space<vmem>>, vector<1x4x256xf32>
    %118 = vector.shape_cast %117 : vector<1x4x256xf32> to vector<4x256xf32>
    %119 = arith.mulf %116, %118 : vector<4x256xf32>
    %c6_103 = arith.constant 6 : index
    %c0_104 = arith.constant 0 : index
    %c0_105 = arith.constant 0 : index
    %120 = vector.load %arg5[%c6_103, %c0_104, %c0_105] : memref<9x8x4xf32, #tpu.memory_space<vmem>>, vector<1x8x4xf32>
    %121 = vector.shape_cast %120 : vector<1x8x4xf32> to vector<8x4xf32>
    %cst_106 = arith.constant dense<0.000000e+00> : vector<8x256xf32>
    %122 = tpu.matmul %121, %119, %cst_106 {dimension_numbers = #tpu.dot_dimension_numbers<[1], [0], [0], [1], [0, 0, 1, 1], [], []>} : vector<8x4xf32>, vector<4x256xf32>, vector<8x256xf32> -> vector<8x256xf32>
    %123 = arith.addf %115, %122 : vector<8x256xf32>
    %c240_i32_107 = arith.constant 240 : i32
    %124 = tpu.dynamic_rotate %72 by %c240_i32_107 dim 1 : vector<4x256xf32>, i32 -> vector<4x256xf32>
    %c7_108 = arith.constant 7 : index
    %c0_109 = arith.constant 0 : index
    %c0_110 = arith.constant 0 : index
    %125 = vector.load %arg2[%c7_108, %c0_109, %c0_110] : memref<9x4x256xf32, #tpu.memory_space<vmem>>, vector<1x4x256xf32>
    %126 = vector.shape_cast %125 : vector<1x4x256xf32> to vector<4x256xf32>
    %127 = arith.mulf %124, %126 : vector<4x256xf32>
    %c7_111 = arith.constant 7 : index
    %c0_112 = arith.constant 0 : index
    %c0_113 = arith.constant 0 : index
    %128 = vector.load %arg5[%c7_111, %c0_112, %c0_113] : memref<9x8x4xf32, #tpu.memory_space<vmem>>, vector<1x8x4xf32>
    %129 = vector.shape_cast %128 : vector<1x8x4xf32> to vector<8x4xf32>
    %cst_114 = arith.constant dense<0.000000e+00> : vector<8x256xf32>
    %130 = tpu.matmul %129, %127, %cst_114 {dimension_numbers = #tpu.dot_dimension_numbers<[1], [0], [0], [1], [0, 0, 1, 1], [], []>} : vector<8x4xf32>, vector<4x256xf32>, vector<8x256xf32> -> vector<8x256xf32>
    %131 = arith.addf %123, %130 : vector<8x256xf32>
    %c239_i32_115 = arith.constant 239 : i32
    %132 = tpu.dynamic_rotate %72 by %c239_i32_115 dim 1 : vector<4x256xf32>, i32 -> vector<4x256xf32>
    %c8_116 = arith.constant 8 : index
    %c0_117 = arith.constant 0 : index
    %c0_118 = arith.constant 0 : index
    %133 = vector.load %arg2[%c8_116, %c0_117, %c0_118] : memref<9x4x256xf32, #tpu.memory_space<vmem>>, vector<1x4x256xf32>
    %134 = vector.shape_cast %133 : vector<1x4x256xf32> to vector<4x256xf32>
    %135 = arith.mulf %132, %134 : vector<4x256xf32>
    %c8_119 = arith.constant 8 : index
    %c0_120 = arith.constant 0 : index
    %c0_121 = arith.constant 0 : index
    %136 = vector.load %arg5[%c8_119, %c0_120, %c0_121] : memref<9x8x4xf32, #tpu.memory_space<vmem>>, vector<1x8x4xf32>
    %137 = vector.shape_cast %136 : vector<1x8x4xf32> to vector<8x4xf32>
    %cst_122 = arith.constant dense<0.000000e+00> : vector<8x256xf32>
    %138 = tpu.matmul %137, %135, %cst_122 {dimension_numbers = #tpu.dot_dimension_numbers<[1], [0], [0], [1], [0, 0, 1, 1], [], []>} : vector<8x4xf32>, vector<4x256xf32>, vector<8x256xf32> -> vector<8x256xf32>
    %139 = arith.addf %131, %138 : vector<8x256xf32>
    %c0_123 = arith.constant 0 : index
    %c0_124 = arith.constant 0 : index
    %140 = vector.load %arg7[%c0_123, %c0_124] : memref<8x4xf32, #tpu.memory_space<vmem>>, vector<8x4xf32>
    %cst_125 = arith.constant dense<0.000000e+00> : vector<8x256xf32>
    %141 = tpu.matmul %140, %0, %cst_125 {dimension_numbers = #tpu.dot_dimension_numbers<[1], [0], [0], [1], [0, 0, 1, 1], [], []>} : vector<8x4xf32>, vector<4x256xf32>, vector<8x256xf32> -> vector<8x256xf32>
    %142 = arith.addf %139, %141 : vector<8x256xf32>
    %c0_126 = arith.constant 0 : index
    %c0_127 = arith.constant 0 : index
    %143 = vector.load %arg6[%c0_126, %c0_127] : memref<8x1xf32, #tpu.memory_space<vmem>>, vector<8x1xf32>
    %144 = vector.broadcast %143 : vector<8x1xf32> to vector<8x256xf32>
    %145 = arith.addf %142, %144 : vector<8x256xf32>
    %cst_128 = arith.constant 0.000000e+00 : f32
    %146 = vector.broadcast %cst_128 : f32 to vector<8x256xf32>
    %147 = arith.maximumf %145, %146 : vector<8x256xf32>
    %c0_129 = arith.constant 0 : index
    %c0_130 = arith.constant 0 : index
    %148 = vector.load %arg8[%c0_129, %c0_130] : memref<8x256xf32, #tpu.memory_space<vmem>>, vector<8x256xf32>
    tpu.vector_store %arg8[%c0_129, %c0_130], %147 {strides = array<i32>} : memref<8x256xf32, #tpu.memory_space<vmem>>, vector<8x256xf32>,
    return
  }
  func.func @transform_0(%arg0: i32) -> (i32, i32) {
    %c0_i32 = arith.constant 0 : i32
    %c0_i32_0 = arith.constant 0 : i32
    return %c0_i32, %arg0 : i32, i32
  }
  func.func @transform_1(%arg0: i32) -> (i32, i32, i32) {
    %c0_i32 = arith.constant 0 : i32
    %c0_i32_0 = arith.constant 0 : i32
    %c0_i32_1 = arith.constant 0 : i32
    %c0_i32_2 = arith.constant 0 : i32
    return %c0_i32, %c0_i32_0, %c0_i32_1 : i32, i32, i32
  }
  func.func @transform_2(%arg0: i32) -> (i32, i32, i32) {
    %c0_i32 = arith.constant 0 : i32
    %c0_i32_0 = arith.constant 0 : i32
    %c0_i32_1 = arith.constant 0 : i32
    %c0_i32_2 = arith.constant 0 : i32
    return %c0_i32, %c0_i32_0, %c0_i32_1 : i32, i32, i32
  }
  func.func @transform_3(%arg0: i32) -> (i32, i32) {
    %c0_i32 = arith.constant 0 : i32
    %c0_i32_0 = arith.constant 0 : i32
    %c0_i32_1 = arith.constant 0 : i32
    return %c0_i32, %c0_i32_0 : i32, i32
  }
  func.func @transform_4(%arg0: i32) -> (i32, i32, i32) {
    %c0_i32 = arith.constant 0 : i32
    %c0_i32_0 = arith.constant 0 : i32
    %c0_i32_1 = arith.constant 0 : i32
    %c0_i32_2 = arith.constant 0 : i32
    return %c0_i32, %c0_i32_0, %c0_i32_1 : i32, i32, i32
  }
  func.func @transform_5(%arg0: i32) -> (i32, i32) {
    %c0_i32 = arith.constant 0 : i32
    %c0_i32_0 = arith.constant 0 : i32
    %c0_i32_1 = arith.constant 0 : i32
    return %c0_i32, %c0_i32_0 : i32, i32
  }
  func.func @transform_6(%arg0: i32) -> (i32, i32) {
    %c0_i32 = arith.constant 0 : i32
    %c0_i32_0 = arith.constant 0 : i32
    %c0_i32_1 = arith.constant 0 : i32
    return %c0_i32, %c0_i32_0 : i32, i32
  }
  func.func @transform_7(%arg0: i32) -> (i32, i32) {
    %c0_i32 = arith.constant 0 : i32
    %c0_i32_0 = arith.constant 0 : i32
    return %c0_i32, %arg0 : i32, i32
  }
}

</mosaic_0001>

<llo_original>
// kernel: tpu_custom_call.1
$region0: #{tpu_custom_call.1}
  #allocation0 [shape = 'u32[]', space=smem, size = 0x4, offset = 0x4, fixed_abs, tag = 'smem constant byte address 0x4 - core index']
  #allocation1 [shape = 'u32[144,128]{1,0:T(1,128)}', space=vmem, size = 0x12000, scoped, tag = 'internal scratch']
  %s0 = inlined_call_operand.vmem [shape: f32[4,512], index: 0, kind: input, shape index: {}]
  %s1 = inlined_call_operand.vmem [shape: f32[9,4,256], index: 1, kind: input, shape index: {}]
  %s2 = inlined_call_operand.vmem [shape: f32[9,4,4], index: 2, kind: input, shape index: {}]
  %s3 = inlined_call_operand.vmem [shape: f32[4,1], index: 3, kind: input, shape index: {}]
  %s4 = inlined_call_operand.vmem [shape: f32[9,8,4], index: 4, kind: input, shape index: {}]
  %s5 = inlined_call_operand.vmem [shape: f32[8,1], index: 5, kind: input, shape index: {}]
  %s6 = inlined_call_operand.vmem [shape: f32[8,4], index: 6, kind: input, shape index: {}]
  %s7 = inlined_call_operand.hbm [shape: f32[8,512], index: 7, kind: output, shape index: {}]
  %s8 = sld [smem:[#allocation0]]
  $region61: #{tpu_custom_call.1} parent=0
    _
  %s10 = ssub.s32 1, %s8
  %s11 = scalar_select 0, %s10, %s8
  $region1: #{tpu_custom_call.1} parent=0
    #allocation2 [shape = 'u8[16384]{0}', space=vmem, size = 0x4000, scoped, tag = 'output window, operand 0']
    #allocation3 [shape = 's32[2]{0}', space=sflag, size = 0x8, scoped, tag = 'scoped memory for tpu_custom_call.1']
    %12 = vsyncpa [#allocation3], 0
    %s13 = scalar_lea.sflag [#allocation3], 1
    %14 = vsyncpa %s13, 0
    loop: start=0, step=1, limit=4
    $region2: #{tpu_custom_call.1} parent=1 // loop_pre_header
      _
    $region3: #{tpu_custom_call.1} parent=1 // loop_header
      %s16 = sphi 0, %s20
      %p17 = scmp.ge.s32.totalorder %s16, 4
      %s26 = sphi 0, %s28
      %s29 = sphi 0, %s26
      %s30 = sphi 0, %s29
      %s46 = sphi 0, %s30
      %s50 = sphi 0, %s50
      %s52 = sphi 0, %s50
      %s53 = sphi 0, %s52
      %s67 = sphi 0, %s53
      %s71 = sphi 0, %s71
      %s73 = sphi 0, %s71
      %s74 = sphi 0, %s73
      %s88 = sphi 0, %s74
      %s92 = sphi 0, %s92
      %s94 = sphi 0, %s92
      %s95 = sphi 0, %s94
      %s109 = sphi 0, %s95
      %s113 = sphi 0, %s113
      %s115 = sphi 0, %s113
      %s116 = sphi 0, %s115
      %s130 = sphi 0, %s116
      %s134 = sphi 0, %s134
      %s136 = sphi 0, %s134
      %s137 = sphi 0, %s136
      %s151 = sphi 0, %s137
      %s155 = sphi 0, %s155
      %s157 = sphi 0, %s155
      %s158 = sphi 0, %s157
      %s172 = sphi 0, %s158
      %s178 = sphi 0, %s180
      %s181 = sphi 0, %s178
      %s182 = sphi 0, %s181
      %s198 = sphi 0, %s182
    $region4: #{tpu_custom_call.1} parent=1 // loop_header_branch
      %19 = sbr.rel (%p17) target = $region8
    $region5: #{tpu_custom_call.1} parent=1 // loop_body
      %s21 = ssub.s32 %s16, 1
      %s22 = ssub.s32 %s16, 2
      %s23 = sadd.s32 %s16, 1
      %s24 = ssub.s32 %s16, %s23
      %p25 = scmp.eq.s32.totalorder %s24, 0
      %s27 = sadd.s32 %s26, 1
      %s28 = scalar_select %p25, %s26, %s27
      %p31 = pneg %p25
      %p32 = scmp.eq.s32.totalorder %s16, 1
      %p33 = por %p31, %p32
      %p34 = scmp.ne.s32.totalorder %s26, %s29
      %p35 = scmp.eq.s32.totalorder %s16, 0
      %p36 = por %p34, %p35
      %p37 = scmp.ne.s32.totalorder %s26, %s29
      %p38 = scmp.eq.s32.totalorder %s21, 1
      %p39 = por %p37, %p38
      %p40 = scmp.ne.s32.totalorder %s29, %s30
      %p41 = scmp.eq.s32.totalorder %s21, 0
      %p42 = por %p40, %p41
      %p43 = scmp.ne.s32.totalorder %s29, %s30
      %p44 = scmp.eq.s32.totalorder %s22, 1
      %p45 = por %p43, %p44
      %p47 = scmp.ne.s32.totalorder %s30, %s46
      %p48 = scmp.eq.s32.totalorder %s22, 0
      %p49 = por %p47, %p48
      %s51 = sadd.s32 %s50, 1
      %p54 = scmp.eq.s32.totalorder %s16, 1
      %p55 = scmp.ne.s32.totalorder %s50, %s52
      %p56 = scmp.eq.s32.totalorder %s16, 0
      %p57 = por %p55, %p56
      %p58 = scmp.ne.s32.totalorder %s50, %s52
      %p59 = scmp.eq.s32.totalorder %s21, 1
      %p60 = por %p58, %p59
      %p61 = scmp.ne.s32.totalorder %s52, %s53
      %p62 = scmp.eq.s32.totalorder %s21, 0
      %p63 = por %p61, %p62
      %p64 = scmp.ne.s32.totalorder %s52, %s53
      %p65 = scmp.eq.s32.totalorder %s22, 1
      %p66 = por %p64, %p65
      %p68 = scmp.ne.s32.totalorder %s53, %s67
      %p69 = scmp.eq.s32.totalorder %s22, 0
      %p70 = por %p68, %p69
      %s72 = sadd.s32 %s71, 1
      %p75 = scmp.eq.s32.totalorder %s16, 1
      %p76 = scmp.ne.s32.totalorder %s71, %s73
      %p77 = scmp.eq.s32.totalorder %s16, 0
      %p78 = por %p76, %p77
      %p79 = scmp.ne.s32.totalorder %s71, %s73
      %p80 = scmp.eq.s32.totalorder %s21, 1
      %p81 = por %p79, %p80
      %p82 = scmp.ne.s32.totalorder %s73, %s74
      %p83 = scmp.eq.s32.totalorder %s21, 0
      %p84 = por %p82, %p83
      %p85 = scmp.ne.s32.totalorder %s73, %s74
      %p86 = scmp.eq.s32.totalorder %s22, 1
      %p87 = por %p85, %p86
      %p89 = scmp.ne.s32.totalorder %s74, %s88
      %p90 = scmp.eq.s32.totalorder %s22, 0
      %p91 = por %p89, %p90
      %s93 = sadd.s32 %s92, 1
      %p96 = scmp.eq.s32.totalorder %s16, 1
      %p97 = scmp.ne.s32.totalorder %s92, %s94
      %p98 = scmp.eq.s32.totalorder %s16, 0
      %p99 = por %p97, %p98
      %p100 = scmp.ne.s32.totalorder %s92, %s94
      %p101 = scmp.eq.s32.totalorder %s21, 1
      %p102 = por %p100, %p101
      %p103 = scmp.ne.s32.totalorder %s94, %s95
      %p104 = scmp.eq.s32.totalorder %s21, 0
      %p105 = por %p103, %p104
      %p106 = scmp.ne.s32.totalorder %s94, %s95
      %p107 = scmp.eq.s32.totalorder %s22, 1
      %p108 = por %p106, %p107
      %p110 = scmp.ne.s32.totalorder %s95, %s109
      %p111 = scmp.eq.s32.totalorder %s22, 0
      %p112 = por %p110, %p111
      %s114 = sadd.s32 %s113, 1
      %p117 = scmp.eq.s32.totalorder %s16, 1
      %p118 = scmp.ne.s32.totalorder %s113, %s115
      %p119 = scmp.eq.s32.totalorder %s16, 0
      %p120 = por %p118, %p119
      %p121 = scmp.ne.s32.totalorder %s113, %s115
      %p122 = scmp.eq.s32.totalorder %s21, 1
      %p123 = por %p121, %p122
      %p124 = scmp.ne.s32.totalorder %s115, %s116
      %p125 = scmp.eq.s32.totalorder %s21, 0
      %p126 = por %p124, %p125
      %p127 = scmp.ne.s32.totalorder %s115, %s116
      %p128 = scmp.eq.s32.totalorder %s22, 1
      %p129 = por %p127, %p128
      %p131 = scmp.ne.s32.totalorder %s116, %s130
      %p132 = scmp.eq.s32.totalorder %s22, 0
      %p133 = por %p131, %p132
      %s135 = sadd.s32 %s134, 1
      %p138 = scmp.eq.s32.totalorder %s16, 1
      %p139 = scmp.ne.s32.totalorder %s134, %s136
      %p140 = scmp.eq.s32.totalorder %s16, 0
      %p141 = por %p139, %p140
      %p142 = scmp.ne.s32.totalorder %s134, %s136
      %p143 = scmp.eq.s32.totalorder %s21, 1
      %p144 = por %p142, %p143
      %p145 = scmp.ne.s32.totalorder %s136, %s137
      %p146 = scmp.eq.s32.totalorder %s21, 0
      %p147 = por %p145, %p146
      %p148 = scmp.ne.s32.totalorder %s136, %s137
      %p149 = scmp.eq.s32.totalorder %s22, 1
      %p150 = por %p148, %p149
      %p152 = scmp.ne.s32.totalorder %s137, %s151
      %p153 = scmp.eq.s32.totalorder %s22, 0
      %p154 = por %p152, %p153
      %s156 = sadd.s32 %s155, 1
      %p159 = scmp.eq.s32.totalorder %s16, 1
      %p160 = scmp.ne.s32.totalorder %s155, %s157
      %p161 = scmp.eq.s32.totalorder %s16, 0
      %p162 = por %p160, %p161
      %p163 = scmp.ne.s32.totalorder %s155, %s157
      %p164 = scmp.eq.s32.totalorder %s21, 1
      %p165 = por %p163, %p164
      %p166 = scmp.ne.s32.totalorder %s157, %s158
      %p167 = scmp.eq.s32.totalorder %s21, 0
      %p168 = por %p166, %p167
      %p169 = scmp.ne.s32.totalorder %s157, %s158
      %p170 = scmp.eq.s32.totalorder %s22, 1
      %p171 = por %p169, %p170
      %p173 = scmp.ne.s32.totalorder %s158, %s172
      %p174 = scmp.eq.s32.totalorder %s22, 0
      %p175 = por %p173, %p174
      %s176 = ssub.s32 %s16, %s23
      %p177 = scmp.eq.s32.totalorder %s176, 0
      %s179 = sadd.s32 %s178, 1
      %s180 = scalar_select %p177, %s178, %s179
      %p183 = pneg %p177
      %p184 = scmp.eq.s32.totalorder %s16, 1
      %p185 = por %p183, %p184
      %p186 = scmp.ne.s32.totalorder %s178, %s181
      %p187 = scmp.eq.s32.totalorder %s16, 0
      %p188 = por %p186, %p187
      %p189 = scmp.ne.s32.totalorder %s178, %s181
      %p190 = scmp.eq.s32.totalorder %s21, 1
      %p191 = por %p189, %p190
      %p192 = scmp.ne.s32.totalorder %s181, %s182
      %p193 = scmp.eq.s32.totalorder %s21, 0
      %p194 = por %p192, %p193
      %p195 = scmp.ne.s32.totalorder %s181, %s182
      %p196 = scmp.eq.s32.totalorder %s22, 1
      %p197 = por %p195, %p196
      %p199 = scmp.ne.s32.totalorder %s182, %s198
      %p200 = scmp.eq.s32.totalorder %s22, 0
      %p201 = por %p199, %p200
      %p202 = scmp.le.s32.totalorder 1, %s16
      %p203 = scmp.lt.s32.totalorder %s16, 3
      %p204 = pnand %p202, %p203
      %p205 = pneg %p204
      // Predicated region
      $region9: #{tpu_custom_call.1} parent=5 // pred_check
        _
      $region10: #{tpu_custom_call.1} parent=5 // pred_check_branch
        %207 = sbr.rel (%p204) target = $region12
      $region11: #{tpu_custom_call.1} parent=5 // pred_region
        %s208 = ssub.s32 %s16, 1
        // Predicated region
        $region13: #{tpu_custom_call.1} parent=11 // pred_check
          %p209 = pneg %p63
        $region14: #{tpu_custom_call.1} parent=11 // pred_check_branch
          %211 = sbr.rel (%p209) target = $region16
        $region15: #{tpu_custom_call.1} parent=11 // pred_region
          _
        $region16: #{tpu_custom_call.1} parent=11 // pred_fallthru
          _
        // Predicated region
        $region17: #{tpu_custom_call.1} parent=11 // pred_check
          %p212 = pneg %p84
        $region18: #{tpu_custom_call.1} parent=11 // pred_check_branch
          %214 = sbr.rel (%p212) target = $region20
        $region19: #{tpu_custom_call.1} parent=11 // pred_region
          _
        $region20: #{tpu_custom_call.1} parent=11 // pred_fallthru
          _
        // Predicated region
        $region21: #{tpu_custom_call.1} parent=11 // pred_check
          %p215 = pneg %p105
        $region22: #{tpu_custom_call.1} parent=11 // pred_check_branch
          %217 = sbr.rel (%p215) target = $region24
        $region23: #{tpu_custom_call.1} parent=11 // pred_region
          _
        $region24: #{tpu_custom_call.1} parent=11 // pred_fallthru
          _
        // Predicated region
        $region25: #{tpu_custom_call.1} parent=11 // pred_check
          %p218 = pneg %p126
        $region26: #{tpu_custom_call.1} parent=11 // pred_check_branch
          %220 = sbr.rel (%p218) target = $region28
        $region27: #{tpu_custom_call.1} parent=11 // pred_region
          _
        $region28: #{tpu_custom_call.1} parent=11 // pred_fallthru
          _
        // Predicated region
        $region29: #{tpu_custom_call.1} parent=11 // pred_check
          %p221 = pneg %p147
        $region30: #{tpu_custom_call.1} parent=11 // pred_check_branch
          %223 = sbr.rel (%p221) target = $region32
        $region31: #{tpu_custom_call.1} parent=11 // pred_region
          _
        $region32: #{tpu_custom_call.1} parent=11 // pred_fallthru
          _
        // Predicated region
        $region33: #{tpu_custom_call.1} parent=11 // pred_check
          %p224 = pneg %p168
        $region34: #{tpu_custom_call.1} parent=11 // pred_check_branch
          %226 = sbr.rel (%p224) target = $region36
        $region35: #{tpu_custom_call.1} parent=11 // pred_region
          _
        $region36: #{tpu_custom_call.1} parent=11 // pred_fallthru
          _
      $region12: #{tpu_custom_call.1} parent=5 // pred_fallthru
        _
      %p227 = scmp.lt.s32.totalorder %s16, 2
      // Predicated region
      $region37: #{tpu_custom_call.1} parent=5 // pred_check
        %p228 = pneg %p227
      $region38: #{tpu_custom_call.1} parent=5 // pred_check_branch
        %230 = sbr.rel (%p228) target = $region40
      $region39: #{tpu_custom_call.1} parent=5 // pred_region
        // Predicated region
        $region41: #{tpu_custom_call.1} parent=39 // pred_check
          %p231 = pneg %p36
        $region42: #{tpu_custom_call.1} parent=39 // pred_check_branch
          %233 = sbr.rel (%p231) target = $region44
        $region43: #{tpu_custom_call.1} parent=39 // pred_region
          %s234 = smul.u32 2, %s16
          %p235 = scmp.lt.s32.totalorder %s234, 3
          %s236 = scalar_select %p235, %s234, 3
          %s237 = smul.addr %s236, 4
          %s238 = scalar_lea.vmem %s0, %s237
          %s239 = smul.u32 2, %s16
        $region44: #{tpu_custom_call.1} parent=39 // pred_fallthru
          _
      $region40: #{tpu_custom_call.1} parent=5 // pred_fallthru
        _
      %p240 = scmp.le.s32.totalorder 1, %s16
      %p241 = scmp.lt.s32.totalorder %s16, 3
      %p242 = pnand %p240, %p241
      %p243 = pneg %p242
      // Predicated region
      $region45: #{tpu_custom_call.1} parent=5 // pred_check
        _
      $region46: #{tpu_custom_call.1} parent=5 // pred_check_branch
        %245 = sbr.rel (%p242) target = $region48
      $region47: #{tpu_custom_call.1} parent=5 // pred_region
        %s246 = ssub.s32 %s16, 1
        %s247 = smul.u32 2, %s21
        %p248 = scmp.lt.s32.totalorder %s247, 3
        %s249 = scalar_select %p248, %s247, 3
        %s250 = smul.addr %s249, 4
        %s251 = scalar_lea.vmem %s0, %s250
        %p252 = pneg %p42
        %p253 = pneg %p39
        %p254 = pneg %p63
        %p255 = pneg %p60
        %p256 = pneg %p84
        %p257 = pneg %p81
        %p258 = pneg %p105
        %p259 = pneg %p102
        %p260 = pneg %p126
        %p261 = pneg %p123
        %p262 = pneg %p147
        %p263 = pneg %p144
        %p264 = pneg %p168
        %p265 = pneg %p165
        %p266 = pneg %p194
        %p267 = pneg %p191
        %s268 = sand.u32 %s181, 1
        %s269 = scalar_lea.sflag [#allocation3], %s268
        %s270 = sand.u32 %s181, 1
        %s271 = smul.addr %s270, 16
        %s272 = scalar_lea.vmem [#allocation2], %s271
        %s273 = smul.u32 2, %s21
        %p274 = scmp.lt.s32.totalorder %s273, 3
        %s275 = scalar_select %p274, %s273, 3
        %s276 = smul.addr %s275, 4
        %s277 = scalar_lea.vmem %s0, %s276
        %s278 = smul.u32 2, %s21
        %s279 = smul.u32 2, %s21
        %v280 = vld [vmem:[%s277] sm:$0xff]
        %v282 = vcombine.high %v280, %v280
        %284 = vrot.lane.b32.xlu0 %v280, 17
        %v285 = vpop.permute.xlu0 %284
        %286 = vrot.lane.b32.xlu0 %v282, 17
        %v287 = vpop.permute.xlu0 %286
        %v288 = vlaneseq
        %v289 = vand.u32 %v288, 127
        %vm290 = vcmp.lt.s32.totalorder %v289, 17
        %v291 = vsel %vm290, %v285, %v287
        %v292 = vsel %vm290, %v287, %v285
        %v293 = vld [vmem:[%s1] sm:$0xff]
        %v295 = vcombine.high %v293, %v293
        %v297 = vmul.f32 %v292, %v293
        %v298 = vmul.f32 %v291, %v295
        %v299 = vld [vmem:[%s2] sm:$0xf]
        %300 = vrot.lane.b32.xlu0 %v280, 16
        %v301 = vpop.permute.xlu0 %300
        %302 = vrot.lane.b32.xlu0 %v282, 16
        %v303 = vpop.permute.xlu0 %302
        %vm304 = vcmp.lt.s32.totalorder %v289, 16
        %v305 = vsel %vm304, %v301, %v303
        %v306 = vsel %vm304, %v303, %v301
        %s307 = scalar_lea.vmem %s1, 8
        %v308 = vld [vmem:[%s307] sm:$0xff]
        %v310 = vcombine.high %v308, %v308
        %v312 = vmul.f32 %v306, %v308
        %v313 = vmul.f32 %v305, %v310
        %s314 = scalar_lea.vmem %s2, 4
        %v315 = vld [vmem:[%s314] sm:$0xf]
        %vm316 = vcmask 31744
        %v318 = vsel %vm316, %v315, 0
        %vm320 = vcmask 1043456
        %v322 = vsel %vm320, %v312, 0
        %v325 = vsel %vm320, %v313, 0
        %327 = vmatprep.subr.mxu0 %v325
        %328 = vmatpush1.msra.mxu0 %v322
        %329 = vmatprep.subr.mxu0 0.0
        %330 = vmatpush1.msra.mxu0 0.0
        %331 = vmatprep.subr.mxu0 0.0
        %332 = vmatpush1.msra.mxu0 0.0
        %333 = vmatprep.subr.mxu0 0.0
        %334 = vmatpush1.msra.mxu0 0.0
        %335 = vmatprep.subr.mxu0 0.0
        %336 = vmatpush1.msra.mxu0 0.0
        %337 = vmatprep.subr.mxu0 0.0
        %338 = vmatpush1.msra.mxu0 0.0
        %339 = vmatprep.subr.mxu0 0.0
        %340 = vmatpush1.msra.mxu0 0.0
        %341 = vmatprep.subr.mxu0 0.0
        %342 = vmatpush1.msra.mxu0 0.0
        %343 = vmatprep.subr.mxu0 0.0
        %344 = vmatpush1.msra.mxu0 0.0
        %345 = vmatprep.subr.mxu0 0.0
        %346 = vmatpush1.msra.mxu0 0.0
        %347 = vmatprep.subr.mxu0 0.0
        %348 = vmatpush1.msra.mxu0 0.0
        %349 = vmatprep.subr.mxu0 0.0
        %350 = vmatpush1.msra.mxu0 0.0
        %351 = vmatprep.subr.mxu0 0.0
        %352 = vmatpush1.msra.mxu0 0.0
        %353 = vmatprep.subr.mxu0 0.0
        %354 = vmatpush1.msra.mxu0 0.0
        %355 = vmatprep.subr.mxu0 0.0
        %356 = vmatpush1.msra.mxu0 0.0
        %357 = vmatprep.subr.mxu0 0.0
        %358 = vmatpush1.msra.mxu0 0.0
        %359 = vmatprep.subr.mxu0 0.0
        %360 = vmatpush1.msra.mxu0 0.0
        %361 = vmatprep.subr.mxu0 0.0
        %362 = vmatpush1.msra.mxu0 0.0
        %363 = vmatprep.subr.mxu0 0.0
        %364 = vmatpush1.msra.mxu0 0.0
        %365 = vmatprep.subr.mxu0 0.0
        %366 = vmatpush1.msra.mxu0 0.0
        %367 = vmatprep.subr.mxu0 0.0
        %368 = vmatpush1.msra.mxu0 0.0
        %369 = vmatprep.subr.mxu0 0.0
        %370 = vmatpush1.msra.mxu0 0.0
        %371 = vmatprep.subr.mxu0 0.0
        %372 = vmatpush1.msra.mxu0 0.0
        %373 = vmatprep.subr.mxu0 0.0
        %374 = vmatpush1.msra.mxu0 0.0
        %375 = vmatprep.subr.mxu0 0.0
        %376 = vmatpush1.msra.mxu0 0.0
        %377 = vmatprep.subr.mxu0 0.0
        %378 = vmatpush1.msra.mxu0 0.0
        %379 = vmatprep.subr.mxu0 0.0
        %380 = vmatpush1.msra.mxu0 0.0
        %381 = vmatprep.subr.mxu0 0.0
        %382 = vmatpush1.msra.mxu0 0.0
        %383 = vmatprep.subr.mxu0 0.0
        %384 = vmatpush1.msra.mxu0 0.0
        %385 = vmatprep.subr.mxu0 0.0
        %386 = vmatpush1.msra.mxu0 0.0
        %387 = vmatprep.subr.mxu0 0.0
        %388 = vmatpush1.msra.mxu0 0.0
        %389 = vmatprep.subr.mxu0 0.0
        %390 = vmatpush1.msra.mxu0 0.0
        %391 = vmatprep.mubr.f32.mxu0 0.0
        %392 = vmatmul.mubr.f32.gmra.mrb[0].mxu0 %v318
        %v393 = vpop.f32.mrb[0].mxu0
        %v394 = vadd.f32 0.0, %v393
        %v395 = vpop.f32.mrb[0].mxu0
        %v396 = vadd.f32 0.0, %v395
        %397 = vdwg.mxu0
        %v399 = vsel %vm316, %v299, 0
        %v402 = vsel %vm320, %v297, 0
        %v405 = vsel %vm320, %v298, 0
        %407 = vmatprep.subr.mxu0 %v405
        %408 = vmatpush1.msra.mxu0 %v402
        %409 = vmatprep.subr.mxu0 0.0
        %410 = vmatpush1.msra.mxu0 0.0
        %411 = vmatprep.subr.mxu0 0.0
        %412 = vmatpush1.msra.mxu0 0.0
        %413 = vmatprep.subr.mxu0 0.0
        %414 = vmatpush1.msra.mxu0 0.0
        %415 = vmatprep.subr.mxu0 0.0
        %416 = vmatpush1.msra.mxu0 0.0
        %417 = vmatprep.subr.mxu0 0.0
        %418 = vmatpush1.msra.mxu0 0.0
        %419 = vmatprep.subr.mxu0 0.0
        %420 = vmatpush1.msra.mxu0 0.0
        %421 = vmatprep.subr.mxu0 0.0
        %422 = vmatpush1.msra.mxu0 0.0
        %423 = vmatprep.subr.mxu0 0.0
        %424 = vmatpush1.msra.mxu0 0.0
        %425 = vmatprep.subr.mxu0 0.0
        %426 = vmatpush1.msra.mxu0 0.0
        %427 = vmatprep.subr.mxu0 0.0
        %428 = vmatpush1.msra.mxu0 0.0
        %429 = vmatprep.subr.mxu0 0.0
        %430 = vmatpush1.msra.mxu0 0.0
        %431 = vmatprep.subr.mxu0 0.0
        %432 = vmatpush1.msra.mxu0 0.0
        %433 = vmatprep.subr.mxu0 0.0
        %434 = vmatpush1.msra.mxu0 0.0
        %435 = vmatprep.subr.mxu0 0.0
        %436 = vmatpush1.msra.mxu0 0.0
        %437 = vmatprep.subr.mxu0 0.0
        %438 = vmatpush1.msra.mxu0 0.0
        %439 = vmatprep.subr.mxu0 0.0
        %440 = vmatpush1.msra.mxu0 0.0
        %441 = vmatprep.subr.mxu0 0.0
        %442 = vmatpush1.msra.mxu0 0.0
        %443 = vmatprep.subr.mxu0 0.0
        %444 = vmatpush1.msra.mxu0 0.0
        %445 = vmatprep.subr.mxu0 0.0
        %446 = vmatpush1.msra.mxu0 0.0
        %447 = vmatprep.subr.mxu0 0.0
        %448 = vmatpush1.msra.mxu0 0.0
        %449 = vmatprep.subr.mxu0 0.0
        %450 = vmatpush1.msra.mxu0 0.0
        %451 = vmatprep.subr.mxu0 0.0
        %452 = vmatpush1.msra.mxu0 0.0
        %453 = vmatprep.subr.mxu0 0.0
        %454 = vmatpush1.msra.mxu0 0.0
        %455 = vmatprep.subr.mxu0 0.0
        %456 = vmatpush1.msra.mxu0 0.0
        %457 = vmatprep.subr.mxu0 0.0
        %458 = vmatpush1.msra.mxu0 0.0
        %459 = vmatprep.subr.mxu0 0.0
        %460 = vmatpush1.msra.mxu0 0.0
        %461 = vmatprep.subr.mxu0 0.0
        %462 = vmatpush1.msra.mxu0 0.0
        %463 = vmatprep.subr.mxu0 0.0
        %464 = vmatpush1.msra.mxu0 0.0
        %465 = vmatprep.subr.mxu0 0.0
        %466 = vmatpush1.msra.mxu0 0.0
        %467 = vmatprep.subr.mxu0 0.0
        %468 = vmatpush1.msra.mxu0 0.0
        %469 = vmatprep.subr.mxu0 0.0
        %470 = vmatpush1.msra.mxu0 0.0
        %471 = vmatprep.mubr.f32.mxu0 0.0
        %472 = vmatmul.mubr.f32.gmra.mrb[0].mxu0 %v399
        %v473 = vpop.f32.mrb[0].mxu0
        %v474 = vadd.f32 %v394, %v473
        %v475 = vpop.f32.mrb[0].mxu0
        %v476 = vadd.f32 %v396, %v475
        %477 = vdwg.mxu0
        %478 = vrot.lane.b32.xlu0 %v280, 15
        %v479 = vpop.permute.xlu0 %478
        %480 = vrot.lane.b32.xlu0 %v282, 15
        %v481 = vpop.permute.xlu0 %480
        %vm482 = vcmp.lt.s32.totalorder %v289, 15
        %v483 = vsel %vm482, %v479, %v481
        %v484 = vsel %vm482, %v481, %v479
        %s485 = scalar_lea.vmem %s1, 16
        %v486 = vld [vmem:[%s485] sm:$0xff]
        %v488 = vcombine.high %v486, %v486
        %v490 = vmul.f32 %v484, %v486
        %v491 = vmul.f32 %v483, %v488
        %s492 = scalar_lea.vmem %s2, 8
        %v493 = vld [vmem:[%s492] sm:$0xf]
        %v495 = vsel %vm316, %v493, 0
        %v498 = vsel %vm320, %v490, 0
        %v501 = vsel %vm320, %v491, 0
        %503 = vmatprep.subr.mxu0 %v501
        %504 = vmatpush1.msra.mxu0 %v498
        %505 = vmatprep.subr.mxu0 0.0
        %506 = vmatpush1.msra.mxu0 0.0
        %507 = vmatprep.subr.mxu0 0.0
        %508 = vmatpush1.msra.mxu0 0.0
        %509 = vmatprep.subr.mxu0 0.0
        %510 = vmatpush1.msra.mxu0 0.0
        %511 = vmatprep.subr.mxu0 0.0
        %512 = vmatpush1.msra.mxu0 0.0
        %513 = vmatprep.subr.mxu0 0.0
        %514 = vmatpush1.msra.mxu0 0.0
        %515 = vmatprep.subr.mxu0 0.0
        %516 = vmatpush1.msra.mxu0 0.0
        %517 = vmatprep.subr.mxu0 0.0
        %518 = vmatpush1.msra.mxu0 0.0
        %519 = vmatprep.subr.mxu0 0.0
        %520 = vmatpush1.msra.mxu0 0.0
        %521 = vmatprep.subr.mxu0 0.0
        %522 = vmatpush1.msra.mxu0 0.0
        %523 = vmatprep.subr.mxu0 0.0
        %524 = vmatpush1.msra.mxu0 0.0
        %525 = vmatprep.subr.mxu0 0.0
        %526 = vmatpush1.msra.mxu0 0.0
        %527 = vmatprep.subr.mxu0 0.0
        %528 = vmatpush1.msra.mxu0 0.0
        %529 = vmatprep.subr.mxu0 0.0
        %530 = vmatpush1.msra.mxu0 0.0
        %531 = vmatprep.subr.mxu0 0.0
        %532 = vmatpush1.msra.mxu0 0.0
        %533 = vmatprep.subr.mxu0 0.0
        %534 = vmatpush1.msra.mxu0 0.0
        %535 = vmatprep.subr.mxu0 0.0
        %536 = vmatpush1.msra.mxu0 0.0
        %537 = vmatprep.subr.mxu0 0.0
        %538 = vmatpush1.msra.mxu0 0.0
        %539 = vmatprep.subr.mxu0 0.0
        %540 = vmatpush1.msra.mxu0 0.0
        %541 = vmatprep.subr.mxu0 0.0
        %542 = vmatpush1.msra.mxu0 0.0
        %543 = vmatprep.subr.mxu0 0.0
        %544 = vmatpush1.msra.mxu0 0.0
        %545 = vmatprep.subr.mxu0 0.0
        %546 = vmatpush1.msra.mxu0 0.0
        %547 = vmatprep.subr.mxu0 0.0
        %548 = vmatpush1.msra.mxu0 0.0
        %549 = vmatprep.subr.mxu0 0.0
        %550 = vmatpush1.msra.mxu0 0.0
        %551 = vmatprep.subr.mxu0 0.0
        %552 = vmatpush1.msra.mxu0 0.0
        %553 = vmatprep.subr.mxu0 0.0
        %554 = vmatpush1.msra.mxu0 0.0
        %555 = vmatprep.subr.mxu0 0.0
        %556 = vmatpush1.msra.mxu0 0.0
        %557 = vmatprep.subr.mxu0 0.0
        %558 = vmatpush1.msra.mxu0 0.0
        %559 = vmatprep.subr.mxu0 0.0
        %560 = vmatpush1.msra.mxu0 0.0
        %561 = vmatprep.subr.mxu0 0.0
        %562 = vmatpush1.msra.mxu0 0.0
        %563 = vmatprep.subr.mxu0 0.0
        %564 = vmatpush1.msra.mxu0 0.0
        %565 = vmatprep.subr.mxu0 0.0
        %566 = vmatpush1.msra.mxu0 0.0
        %567 = vmatprep.mubr.f32.mxu0 0.0
        %568 = vmatmul.mubr.f32.gmra.mrb[0].mxu0 %v495
        %v569 = vpop.f32.mrb[0].mxu0
        %v570 = vadd.f32 0.0, %v569
        %v571 = vpop.f32.mrb[0].mxu0
        %v572 = vadd.f32 0.0, %v571
        %573 = vdwg.mxu0
        %v574 = vadd.f32 %v474, %v570
        %v575 = vadd.f32 %v476, %v572
        %576 = vrot.lane.b32.xlu0 %v280, 1
        %v577 = vpop.permute.xlu0 %576
        %578 = vrot.lane.b32.xlu0 %v282, 1
        %v579 = vpop.permute.xlu0 %578
        %vm580 = vcmp.lt.s32.totalorder %v289, 1
        %v581 = vsel %vm580, %v577, %v579
        %v582 = vsel %vm580, %v579, %v577
        %s583 = scalar_lea.vmem %s1, 24
        %v584 = vld [vmem:[%s583] sm:$0xff]
        %v586 = vcombine.high %v584, %v584
        %v588 = vmul.f32 %v582, %v584
        %v589 = vmul.f32 %v581, %v586
        %s590 = scalar_lea.vmem %s2, 12
        %v591 = vld [vmem:[%s590] sm:$0xf]
        %v593 = vsel %vm316, %v591, 0
        %v596 = vsel %vm320, %v588, 0
        %v599 = vsel %vm320, %v589, 0
        %601 = vmatprep.subr.mxu0 %v599
        %602 = vmatpush1.msra.mxu0 %v596
        %603 = vmatprep.subr.mxu0 0.0
        %604 = vmatpush1.msra.mxu0 0.0
        %605 = vmatprep.subr.mxu0 0.0
        %606 = vmatpush1.msra.mxu0 0.0
        %607 = vmatprep.subr.mxu0 0.0
        %608 = vmatpush1.msra.mxu0 0.0
        %609 = vmatprep.subr.mxu0 0.0
        %610 = vmatpush1.msra.mxu0 0.0
        %611 = vmatprep.subr.mxu0 0.0
        %612 = vmatpush1.msra.mxu0 0.0
        %613 = vmatprep.subr.mxu0 0.0
        %614 = vmatpush1.msra.mxu0 0.0
        %615 = vmatprep.subr.mxu0 0.0
        %616 = vmatpush1.msra.mxu0 0.0
        %617 = vmatprep.subr.mxu0 0.0
        %618 = vmatpush1.msra.mxu0 0.0
        %619 = vmatprep.subr.mxu0 0.0
        %620 = vmatpush1.msra.mxu0 0.0
        %621 = vmatprep.subr.mxu0 0.0
        %622 = vmatpush1.msra.mxu0 0.0
        %623 = vmatprep.subr.mxu0 0.0
        %624 = vmatpush1.msra.mxu0 0.0
        %625 = vmatprep.subr.mxu0 0.0
        %626 = vmatpush1.msra.mxu0 0.0
        %627 = vmatprep.subr.mxu0 0.0
        %628 = vmatpush1.msra.mxu0 0.0
        %629 = vmatprep.subr.mxu0 0.0
        %630 = vmatpush1.msra.mxu0 0.0
        %631 = vmatprep.subr.mxu0 0.0
        %632 = vmatpush1.msra.mxu0 0.0
        %633 = vmatprep.subr.mxu0 0.0
        %634 = vmatpush1.msra.mxu0 0.0
        %635 = vmatprep.subr.mxu0 0.0
        %636 = vmatpush1.msra.mxu0 0.0
        %637 = vmatprep.subr.mxu0 0.0
        %638 = vmatpush1.msra.mxu0 0.0
        %639 = vmatprep.subr.mxu0 0.0
        %640 = vmatpush1.msra.mxu0 0.0
        %641 = vmatprep.subr.mxu0 0.0
        %642 = vmatpush1.msra.mxu0 0.0
        %643 = vmatprep.subr.mxu0 0.0
        %644 = vmatpush1.msra.mxu0 0.0
        %645 = vmatprep.subr.mxu0 0.0
        %646 = vmatpush1.msra.mxu0 0.0
        %647 = vmatprep.subr.mxu0 0.0
        %648 = vmatpush1.msra.mxu0 0.0
        %649 = vmatprep.subr.mxu0 0.0
        %650 = vmatpush1.msra.mxu0 0.0
        %651 = vmatprep.subr.mxu0 0.0
        %652 = vmatpush1.msra.mxu0 0.0
        %653 = vmatprep.subr.mxu0 0.0
        %654 = vmatpush1.msra.mxu0 0.0
        %655 = vmatprep.subr.mxu0 0.0
        %656 = vmatpush1.msra.mxu0 0.0
        %657 = vmatprep.subr.mxu0 0.0
        %658 = vmatpush1.msra.mxu0 0.0
        %659 = vmatprep.subr.mxu0 0.0
        %660 = vmatpush1.msra.mxu0 0.0
        %661 = vmatprep.subr.mxu0 0.0
        %662 = vmatpush1.msra.mxu0 0.0
        %663 = vmatprep.subr.mxu0 0.0
        %664 = vmatpush1.msra.mxu0 0.0
        %665 = vmatprep.mubr.f32.mxu0 0.0
        %666 = vmatmul.mubr.f32.gmra.mrb[0].mxu0 %v593
        %v667 = vpop.f32.mrb[0].mxu0
        %v668 = vadd.f32 0.0, %v667
        %v669 = vpop.f32.mrb[0].mxu0
        %v670 = vadd.f32 0.0, %v669
        %671 = vdwg.mxu0
        %v672 = vadd.f32 %v574, %v668
        %v673 = vadd.f32 %v575, %v670
        %s674 = scalar_lea.vmem %s2, 16
        %v675 = vld [vmem:[%s674] sm:$0xf]
        %v677 = vsel %vm316, %v675, 0
        %v679 = vsel %vm320, %v280, 0
        %v681 = vsel %vm320, %v282, 0
        %683 = vmatprep.subr.mxu0 %v681
        %684 = vmatpush1.msra.mxu0 %v679
        %685 = vmatprep.subr.mxu0 0.0
        %686 = vmatpush1.msra.mxu0 0.0
        %687 = vmatprep.subr.mxu0 0.0
        %688 = vmatpush1.msra.mxu0 0.0
        %689 = vmatprep.subr.mxu0 0.0
        %690 = vmatpush1.msra.mxu0 0.0
        %691 = vmatprep.subr.mxu0 0.0
        %692 = vmatpush1.msra.mxu0 0.0
        %693 = vmatprep.subr.mxu0 0.0
        %694 = vmatpush1.msra.mxu0 0.0
        %695 = vmatprep.subr.mxu0 0.0
        %696 = vmatpush1.msra.mxu0 0.0
        %697 = vmatprep.subr.mxu0 0.0
        %698 = vmatpush1.msra.mxu0 0.0
        %699 = vmatprep.subr.mxu0 0.0
        %700 = vmatpush1.msra.mxu0 0.0
        %701 = vmatprep.subr.mxu0 0.0
        %702 = vmatpush1.msra.mxu0 0.0
        %703 = vmatprep.subr.mxu0 0.0
        %704 = vmatpush1.msra.mxu0 0.0
        %705 = vmatprep.subr.mxu0 0.0
        %706 = vmatpush1.msra.mxu0 0.0
        %707 = vmatprep.subr.mxu0 0.0
        %708 = vmatpush1.msra.mxu0 0.0
        %709 = vmatprep.subr.mxu0 0.0
        %710 = vmatpush1.msra.mxu0 0.0
        %711 = vmatprep.subr.mxu0 0.0
        %712 = vmatpush1.msra.mxu0 0.0
        %713 = vmatprep.subr.mxu0 0.0
        %714 = vmatpush1.msra.mxu0 0.0
        %715 = vmatprep.subr.mxu0 0.0
        %716 = vmatpush1.msra.mxu0 0.0
        %717 = vmatprep.subr.mxu0 0.0
        %718 = vmatpush1.msra.mxu0 0.0
        %719 = vmatprep.subr.mxu0 0.0
        %720 = vmatpush1.msra.mxu0 0.0
        %721 = vmatprep.subr.mxu0 0.0
        %722 = vmatpush1.msra.mxu0 0.0
        %723 = vmatprep.subr.mxu0 0.0
        %724 = vmatpush1.msra.mxu0 0.0
        %725 = vmatprep.subr.mxu0 0.0
        %726 = vmatpush1.msra.mxu0 0.0
        %727 = vmatprep.subr.mxu0 0.0
        %728 = vmatpush1.msra.mxu0 0.0
        %729 = vmatprep.subr.mxu0 0.0
        %730 = vmatpush1.msra.mxu0 0.0
        %731 = vmatprep.subr.mxu0 0.0
        %732 = vmatpush1.msra.mxu0 0.0
        %733 = vmatprep.subr.mxu0 0.0
        %734 = vmatpush1.msra.mxu0 0.0
        %735 = vmatprep.subr.mxu0 0.0
        %736 = vmatpush1.msra.mxu0 0.0
        %737 = vmatprep.subr.mxu0 0.0
        %738 = vmatpush1.msra.mxu0 0.0
        %739 = vmatprep.subr.mxu0 0.0
        %740 = vmatpush1.msra.mxu0 0.0
        %741 = vmatprep.subr.mxu0 0.0
        %742 = vmatpush1.msra.mxu0 0.0
        %743 = vmatprep.subr.mxu0 0.0
        %744 = vmatpush1.msra.mxu0 0.0
        %745 = vmatprep.subr.mxu0 0.0
        %746 = vmatpush1.msra.mxu0 0.0
        %747 = vmatprep.mubr.f32.mxu0 0.0
        %748 = vmatmul.mubr.f32.gmra.mrb[0].mxu0 %v677
        %v749 = vpop.f32.mrb[0].mxu0
        %v750 = vadd.f32 0.0, %v749
        %v751 = vpop.f32.mrb[0].mxu0
        %v752 = vadd.f32 0.0, %v751
        %753 = vdwg.mxu0
        %v754 = vadd.f32 %v672, %v750
        %v755 = vadd.f32 %v673, %v752
        %756 = vrot.lane.b32.xlu0 %v280, 127
        %v757 = vpop.permute.xlu0 %756
        %758 = vrot.lane.b32.xlu0 %v282, 127
        %v759 = vpop.permute.xlu0 %758
        %vm760 = vcmp.lt.s32.totalorder %v289, 127
        %v761 = vsel %vm760, %v757, %v759
        %v762 = vsel %vm760, %v759, %v757
        %s763 = scalar_lea.vmem %s1, 40
        %v764 = vld [vmem:[%s763] sm:$0xff]
        %v766 = vcombine.high %v764, %v764
        %v768 = vmul.f32 %v761, %v764
        %v769 = vmul.f32 %v762, %v766
        %s770 = scalar_lea.vmem %s2, 20
        %v771 = vld [vmem:[%s770] sm:$0xf]
        %v773 = vsel %vm316, %v771, 0
        %v776 = vsel %vm320, %v768, 0
        %v779 = vsel %vm320, %v769, 0
        %781 = vmatprep.subr.mxu0 %v779
        %782 = vmatpush1.msra.mxu0 %v776
        %783 = vmatprep.subr.mxu0 0.0
        %784 = vmatpush1.msra.mxu0 0.0
        %785 = vmatprep.subr.mxu0 0.0
        %786 = vmatpush1.msra.mxu0 0.0
        %787 = vmatprep.subr.mxu0 0.0
        %788 = vmatpush1.msra.mxu0 0.0
        %789 = vmatprep.subr.mxu0 0.0
        %790 = vmatpush1.msra.mxu0 0.0
        %791 = vmatprep.subr.mxu0 0.0
        %792 = vmatpush1.msra.mxu0 0.0
        %793 = vmatprep.subr.mxu0 0.0
        %794 = vmatpush1.msra.mxu0 0.0
        %795 = vmatprep.subr.mxu0 0.0
        %796 = vmatpush1.msra.mxu0 0.0
        %797 = vmatprep.subr.mxu0 0.0
        %798 = vmatpush1.msra.mxu0 0.0
        %799 = vmatprep.subr.mxu0 0.0
        %800 = vmatpush1.msra.mxu0 0.0
        %801 = vmatprep.subr.mxu0 0.0
        %802 = vmatpush1.msra.mxu0 0.0
        %803 = vmatprep.subr.mxu0 0.0
        %804 = vmatpush1.msra.mxu0 0.0
        %805 = vmatprep.subr.mxu0 0.0
        %806 = vmatpush1.msra.mxu0 0.0
        %807 = vmatprep.subr.mxu0 0.0
        %808 = vmatpush1.msra.mxu0 0.0
        %809 = vmatprep.subr.mxu0 0.0
        %810 = vmatpush1.msra.mxu0 0.0
        %811 = vmatprep.subr.mxu0 0.0
        %812 = vmatpush1.msra.mxu0 0.0
        %813 = vmatprep.subr.mxu0 0.0
        %814 = vmatpush1.msra.mxu0 0.0
        %815 = vmatprep.subr.mxu0 0.0
        %816 = vmatpush1.msra.mxu0 0.0
        %817 = vmatprep.subr.mxu0 0.0
        %818 = vmatpush1.msra.mxu0 0.0
        %819 = vmatprep.subr.mxu0 0.0
        %820 = vmatpush1.msra.mxu0 0.0
        %821 = vmatprep.subr.mxu0 0.0
        %822 = vmatpush1.msra.mxu0 0.0
        %823 = vmatprep.subr.mxu0 0.0
        %824 = vmatpush1.msra.mxu0 0.0
        %825 = vmatprep.subr.mxu0 0.0
        %826 = vmatpush1.msra.mxu0 0.0
        %827 = vmatprep.subr.mxu0 0.0
        %828 = vmatpush1.msra.mxu0 0.0
        %829 = vmatprep.subr.mxu0 0.0
        %830 = vmatpush1.msra.mxu0 0.0
        %831 = vmatprep.subr.mxu0 0.0
        %832 = vmatpush1.msra.mxu0 0.0
        %833 = vmatprep.subr.mxu0 0.0
        %834 = vmatpush1.msra.mxu0 0.0
        %835 = vmatprep.subr.mxu0 0.0
        %836 = vmatpush1.msra.mxu0 0.0
        %837 = vmatprep.subr.mxu0 0.0
        %838 = vmatpush1.msra.mxu0 0.0
        %839 = vmatprep.subr.mxu0 0.0
        %840 = vmatpush1.msra.mxu0 0.0
        %841 = vmatprep.subr.mxu0 0.0
        %842 = vmatpush1.msra.mxu0 0.0
        %843 = vmatprep.subr.mxu0 0.0
        %844 = vmatpush1.msra.mxu0 0.0
        %845 = vmatprep.mubr.f32.mxu0 0.0
        %846 = vmatmul.mubr.f32.gmra.mrb[0].mxu0 %v773
        %v847 = vpop.f32.mrb[0].mxu0
        %v848 = vadd.f32 0.0, %v847
        %v849 = vpop.f32.mrb[0].mxu0
        %v850 = vadd.f32 0.0, %v849
        %851 = vdwg.mxu0
        %v852 = vadd.f32 %v754, %v848
        %v853 = vadd.f32 %v755, %v850
        %854 = vrot.lane.b32.xlu0 %v280, 113
        %v855 = vpop.permute.xlu0 %854
        %856 = vrot.lane.b32.xlu0 %v282, 113
        %v857 = vpop.permute.xlu0 %856
        %vm858 = vcmp.lt.s32.totalorder %v289, 113
        %v859 = vsel %vm858, %v855, %v857
        %v860 = vsel %vm858, %v857, %v855
        %s861 = scalar_lea.vmem %s1, 48
        %v862 = vld [vmem:[%s861] sm:$0xff]
        %v864 = vcombine.high %v862, %v862
        %v866 = vmul.f32 %v859, %v862
        %v867 = vmul.f32 %v860, %v864
        %s868 = scalar_lea.vmem %s2, 24
        %v869 = vld [vmem:[%s868] sm:$0xf]
        %v871 = vsel %vm316, %v869, 0
        %v874 = vsel %vm320, %v866, 0
        %v877 = vsel %vm320, %v867, 0
        %879 = vmatprep.subr.mxu0 %v877
        %880 = vmatpush1.msra.mxu0 %v874
        %881 = vmatprep.subr.mxu0 0.0
        %882 = vmatpush1.msra.mxu0 0.0
        %883 = vmatprep.subr.mxu0 0.0
        %884 = vmatpush1.msra.mxu0 0.0
        %885 = vmatprep.subr.mxu0 0.0
        %886 = vmatpush1.msra.mxu0 0.0
        %887 = vmatprep.subr.mxu0 0.0
        %888 = vmatpush1.msra.mxu0 0.0
        %889 = vmatprep.subr.mxu0 0.0
        %890 = vmatpush1.msra.mxu0 0.0
        %891 = vmatprep.subr.mxu0 0.0
        %892 = vmatpush1.msra.mxu0 0.0
        %893 = vmatprep.subr.mxu0 0.0
        %894 = vmatpush1.msra.mxu0 0.0
        %895 = vmatprep.subr.mxu0 0.0
        %896 = vmatpush1.msra.mxu0 0.0
        %897 = vmatprep.subr.mxu0 0.0
        %898 = vmatpush1.msra.mxu0 0.0
        %899 = vmatprep.subr.mxu0 0.0
        %900 = vmatpush1.msra.mxu0 0.0
        %901 = vmatprep.subr.mxu0 0.0
        %902 = vmatpush1.msra.mxu0 0.0
        %903 = vmatprep.subr.mxu0 0.0
        %904 = vmatpush1.msra.mxu0 0.0
        %905 = vmatprep.subr.mxu0 0.0
        %906 = vmatpush1.msra.mxu0 0.0
        %907 = vmatprep.subr.mxu0 0.0
        %908 = vmatpush1.msra.mxu0 0.0
        %909 = vmatprep.subr.mxu0 0.0
        %910 = vmatpush1.msra.mxu0 0.0
        %911 = vmatprep.subr.mxu0 0.0
        %912 = vmatpush1.msra.mxu0 0.0
        %913 = vmatprep.subr.mxu0 0.0
        %914 = vmatpush1.msra.mxu0 0.0
        %915 = vmatprep.subr.mxu0 0.0
        %916 = vmatpush1.msra.mxu0 0.0
        %917 = vmatprep.subr.mxu0 0.0
        %918 = vmatpush1.msra.mxu0 0.0
        %919 = vmatprep.subr.mxu0 0.0
        %920 = vmatpush1.msra.mxu0 0.0
        %921 = vmatprep.subr.mxu0 0.0
        %922 = vmatpush1.msra.mxu0 0.0
        %923 = vmatprep.subr.mxu0 0.0
        %924 = vmatpush1.msra.mxu0 0.0
        %925 = vmatprep.subr.mxu0 0.0
        %926 = vmatpush1.msra.mxu0 0.0
        %927 = vmatprep.subr.mxu0 0.0
        %928 = vmatpush1.msra.mxu0 0.0
        %929 = vmatprep.subr.mxu0 0.0
        %930 = vmatpush1.msra.mxu0 0.0
        %931 = vmatprep.subr.mxu0 0.0
        %932 = vmatpush1.msra.mxu0 0.0
        %933 = vmatprep.subr.mxu0 0.0
        %934 = vmatpush1.msra.mxu0 0.0
        %935 = vmatprep.subr.mxu0 0.0
        %936 = vmatpush1.msra.mxu0 0.0
        %937 = vmatprep.subr.mxu0 0.0
        %938 = vmatpush1.msra.mxu0 0.0
        %939 = vmatprep.subr.mxu0 0.0
        %940 = vmatpush1.msra.mxu0 0.0
        %941 = vmatprep.subr.mxu0 0.0
        %942 = vmatpush1.msra.mxu0 0.0
        %943 = vmatprep.mubr.f32.mxu0 0.0
        %944 = vmatmul.mubr.f32.gmra.mrb[0].mxu0 %v871
        %v945 = vpop.f32.mrb[0].mxu0
        %v946 = vadd.f32 0.0, %v945
        %v947 = vpop.f32.mrb[0].mxu0
        %v948 = vadd.f32 0.0, %v947
        %949 = vdwg.mxu0
        %v950 = vadd.f32 %v852, %v946
        %v951 = vadd.f32 %v853, %v948
        %952 = vrot.lane.b32.xlu0 %v280, 112
        %v953 = vpop.permute.xlu0 %952
        %954 = vrot.lane.b32.xlu0 %v282, 112
        %v955 = vpop.permute.xlu0 %954
        %vm956 = vcmp.lt.s32.totalorder %v289, 112
        %v957 = vsel %vm956, %v953, %v955
        %v958 = vsel %vm956, %v955, %v953
        %s959 = scalar_lea.vmem %s1, 56
        %v960 = vld [vmem:[%s959] sm:$0xff]
        %v962 = vcombine.high %v960, %v960
        %v964 = vmul.f32 %v957, %v960
        %v965 = vmul.f32 %v958, %v962
        %s966 = scalar_lea.vmem %s2, 28
        %v967 = vld [vmem:[%s966] sm:$0xf]
        %v969 = vsel %vm316, %v967, 0
        %v972 = vsel %vm320, %v964, 0
        %v975 = vsel %vm320, %v965, 0
        %977 = vmatprep.subr.mxu0 %v975
        %978 = vmatpush1.msra.mxu0 %v972
        %979 = vmatprep.subr.mxu0 0.0
        %980 = vmatpush1.msra.mxu0 0.0
        %981 = vmatprep.subr.mxu0 0.0
        %982 = vmatpush1.msra.mxu0 0.0
        %983 = vmatprep.subr.mxu0 0.0
        %984 = vmatpush1.msra.mxu0 0.0
        %985 = vmatprep.subr.mxu0 0.0
        %986 = vmatpush1.msra.mxu0 0.0
        %987 = vmatprep.subr.mxu0 0.0
        %988 = vmatpush1.msra.mxu0 0.0
        %989 = vmatprep.subr.mxu0 0.0
        %990 = vmatpush1.msra.mxu0 0.0
        %991 = vmatprep.subr.mxu0 0.0
        %992 = vmatpush1.msra.mxu0 0.0
        %993 = vmatprep.subr.mxu0 0.0
        %994 = vmatpush1.msra.mxu0 0.0
        %995 = vmatprep.subr.mxu0 0.0
        %996 = vmatpush1.msra.mxu0 0.0
        %997 = vmatprep.subr.mxu0 0.0
        %998 = vmatpush1.msra.mxu0 0.0
        %999 = vmatprep.subr.mxu0 0.0
        %1000 = vmatpush1.msra.mxu0 0.0
        %1001 = vmatprep.subr.mxu0 0.0
        %1002 = vmatpush1.msra.mxu0 0.0
        %1003 = vmatprep.subr.mxu0 0.0
        %1004 = vmatpush1.msra.mxu0 0.0
        %1005 = vmatprep.subr.mxu0 0.0
        %1006 = vmatpush1.msra.mxu0 0.0
        %1007 = vmatprep.subr.mxu0 0.0
        %1008 = vmatpush1.msra.mxu0 0.0
        %1009 = vmatprep.subr.mxu0 0.0
        %1010 = vmatpush1.msra.mxu0 0.0
        %1011 = vmatprep.subr.mxu0 0.0
        %1012 = vmatpush1.msra.mxu0 0.0
        %1013 = vmatprep.subr.mxu0 0.0
        %1014 = vmatpush1.msra.mxu0 0.0
        %1015 = vmatprep.subr.mxu0 0.0
        %1016 = vmatpush1.msra.mxu0 0.0
        %1017 = vmatprep.subr.mxu0 0.0
        %1018 = vmatpush1.msra.mxu0 0.0
        %1019 = vmatprep.subr.mxu0 0.0
        %1020 = vmatpush1.msra.mxu0 0.0
        %1021 = vmatprep.subr.mxu0 0.0
        %1022 = vmatpush1.msra.mxu0 0.0
        %1023 = vmatprep.subr.mxu0 0.0
        %1024 = vmatpush1.msra.mxu0 0.0
        %1025 = vmatprep.subr.mxu0 0.0
        %1026 = vmatpush1.msra.mxu0 0.0
        %1027 = vmatprep.subr.mxu0 0.0
        %1028 = vmatpush1.msra.mxu0 0.0
        %1029 = vmatprep.subr.mxu0 0.0
        %1030 = vmatpush1.msra.mxu0 0.0
        %1031 = vmatprep.subr.mxu0 0.0
        %1032 = vmatpush1.msra.mxu0 0.0
        %1033 = vmatprep.subr.mxu0 0.0
        %1034 = vmatpush1.msra.mxu0 0.0
        %1035 = vmatprep.subr.mxu0 0.0
        %1036 = vmatpush1.msra.mxu0 0.0
        %1037 = vmatprep.subr.mxu0 0.0
        %1038 = vmatpush1.msra.mxu0 0.0
        %1039 = vmatprep.subr.mxu0 0.0
        %1040 = vmatpush1.msra.mxu0 0.0
        %1041 = vmatprep.mubr.f32.mxu0 0.0
        %1042 = vmatmul.mubr.f32.gmra.mrb[0].mxu0 %v969
        %v1043 = vpop.f32.mrb[0].mxu0
        %v1044 = vadd.f32 0.0, %v1043
        %v1045 = vpop.f32.mrb[0].mxu0
        %v1046 = vadd.f32 0.0, %v1045
        %1047 = vdwg.mxu0
        %v1048 = vadd.f32 %v950, %v1044
        %v1049 = vadd.f32 %v951, %v1046
        %1050 = vrot.lane.b32.xlu0 %v280, 111
        %v1051 = vpop.permute.xlu0 %1050
        %1052 = vrot.lane.b32.xlu0 %v282, 111
        %v1053 = vpop.permute.xlu0 %1052
        %vm1054 = vcmp.lt.s32.totalorder %v289, 111
        %v1055 = vsel %vm1054, %v1051, %v1053
        %v1056 = vsel %vm1054, %v1053, %v1051
        %s1057 = scalar_lea.vmem %s1, 64
        %v1058 = vld [vmem:[%s1057] sm:$0xff]
        %v1060 = vcombine.high %v1058, %v1058
        %v1062 = vmul.f32 %v1055, %v1058
        %v1063 = vmul.f32 %v1056, %v1060
        %s1064 = scalar_lea.vmem %s2, 32
        %v1065 = vld [vmem:[%s1064] sm:$0xf]
        %v1067 = vsel %vm316, %v1065, 0
        %v1070 = vsel %vm320, %v1062, 0
        %v1073 = vsel %vm320, %v1063, 0
        %1075 = vmatprep.subr.mxu0 %v1073
        %1076 = vmatpush1.msra.mxu0 %v1070
        %1077 = vmatprep.subr.mxu0 0.0
        %1078 = vmatpush1.msra.mxu0 0.0
        %1079 = vmatprep.subr.mxu0 0.0
        %1080 = vmatpush1.msra.mxu0 0.0
        %1081 = vmatprep.subr.mxu0 0.0
        %1082 = vmatpush1.msra.mxu0 0.0
        %1083 = vmatprep.subr.mxu0 0.0
        %1084 = vmatpush1.msra.mxu0 0.0
        %1085 = vmatprep.subr.mxu0 0.0
        %1086 = vmatpush1.msra.mxu0 0.0
        %1087 = vmatprep.subr.mxu0 0.0
        %1088 = vmatpush1.msra.mxu0 0.0
        %1089 = vmatprep.subr.mxu0 0.0
        %1090 = vmatpush1.msra.mxu0 0.0
        %1091 = vmatprep.subr.mxu0 0.0
        %1092 = vmatpush1.msra.mxu0 0.0
        %1093 = vmatprep.subr.mxu0 0.0
        %1094 = vmatpush1.msra.mxu0 0.0
        %1095 = vmatprep.subr.mxu0 0.0
        %1096 = vmatpush1.msra.mxu0 0.0
        %1097 = vmatprep.subr.mxu0 0.0
        %1098 = vmatpush1.msra.mxu0 0.0
        %1099 = vmatprep.subr.mxu0 0.0
        %1100 = vmatpush1.msra.mxu0 0.0
        %1101 = vmatprep.subr.mxu0 0.0
        %1102 = vmatpush1.msra.mxu0 0.0
        %1103 = vmatprep.subr.mxu0 0.0
        %1104 = vmatpush1.msra.mxu0 0.0
        %1105 = vmatprep.subr.mxu0 0.0
        %1106 = vmatpush1.msra.mxu0 0.0
        %1107 = vmatprep.subr.mxu0 0.0
        %1108 = vmatpush1.msra.mxu0 0.0
        %1109 = vmatprep.subr.mxu0 0.0
        %1110 = vmatpush1.msra.mxu0 0.0
        %1111 = vmatprep.subr.mxu0 0.0
        %1112 = vmatpush1.msra.mxu0 0.0
        %1113 = vmatprep.subr.mxu0 0.0
        %1114 = vmatpush1.msra.mxu0 0.0
        %1115 = vmatprep.subr.mxu0 0.0
        %1116 = vmatpush1.msra.mxu0 0.0
        %1117 = vmatprep.subr.mxu0 0.0
        %1118 = vmatpush1.msra.mxu0 0.0
        %1119 = vmatprep.subr.mxu0 0.0
        %1120 = vmatpush1.msra.mxu0 0.0
        %1121 = vmatprep.subr.mxu0 0.0
        %1122 = vmatpush1.msra.mxu0 0.0
        %1123 = vmatprep.subr.mxu0 0.0
        %1124 = vmatpush1.msra.mxu0 0.0
        %1125 = vmatprep.subr.mxu0 0.0
        %1126 = vmatpush1.msra.mxu0 0.0
        %1127 = vmatprep.subr.mxu0 0.0
        %1128 = vmatpush1.msra.mxu0 0.0
        %1129 = vmatprep.subr.mxu0 0.0
        %1130 = vmatpush1.msra.mxu0 0.0
        %1131 = vmatprep.subr.mxu0 0.0
        %1132 = vmatpush1.msra.mxu0 0.0
        %1133 = vmatprep.subr.mxu0 0.0
        %1134 = vmatpush1.msra.mxu0 0.0
        %1135 = vmatprep.subr.mxu0 0.0
        %1136 = vmatpush1.msra.mxu0 0.0
        %1137 = vmatprep.subr.mxu0 0.0
        %1138 = vmatpush1.msra.mxu0 0.0
        %1139 = vmatprep.mubr.f32.mxu0 0.0
        %1140 = vmatmul.mubr.f32.gmra.mrb[0].mxu0 %v1067
        %v1141 = vpop.f32.mrb[0].mxu0
        %v1142 = vadd.f32 0.0, %v1141
        %v1143 = vpop.f32.mrb[0].mxu0
        %v1144 = vadd.f32 0.0, %v1143
        %1145 = vdwg.mxu0
        %v1146 = vadd.f32 %v1048, %v1142
        %v1147 = vadd.f32 %v1049, %v1144
        %v1148 = vld [vmem:[%s3] sm:$0xf]
        %1150 = vset.pattern.permute.xlu0 0
        %1151 = vperm.xlu0 %1150, %v1148
        %v1152 = vpop.permute.xlu0 %1151
        %v1154 = vadd.f32 %v1146, %v1152
        %v1155 = vadd.f32 %v1147, %v1152
        %v1156 = vmax.f32 %v1154, 0.0
        %v1157 = vmax.f32 %v1155, 0.0
        %1158 = vrot.lane.b32.xlu0 %v1156, 17
        %v1159 = vpop.permute.xlu0 %1158
        %1160 = vrot.lane.b32.xlu0 %v1157, 17
        %v1161 = vpop.permute.xlu0 %1160
        %v1162 = vsel %vm290, %v1159, %v1161
        %v1163 = vsel %vm290, %v1161, %v1159
        %v1164 = vmul.f32 %v1163, %v293
        %v1165 = vmul.f32 %v1162, %v295
        %v1166 = vld [vmem:[%s4] sm:$0xff]
        %1167 = vrot.lane.b32.xlu0 %v1156, 16
        %v1168 = vpop.permute.xlu0 %1167
        %1169 = vrot.lane.b32.xlu0 %v1157, 16
        %v1170 = vpop.permute.xlu0 %1169
        %v1171 = vsel %vm304, %v1168, %v1170
        %v1172 = vsel %vm304, %v1170, %v1168
        %v1173 = vmul.f32 %v1172, %v308
        %v1174 = vmul.f32 %v1171, %v310
        %s1175 = scalar_lea.vmem %s4, 8
        %v1176 = vld [vmem:[%s1175] sm:$0xff]
        %v1178 = vsel %vm316, %v1176, 0
        %v1181 = vsel %vm320, %v1173, 0
        %v1184 = vsel %vm320, %v1174, 0
        %1186 = vmatprep.subr.mxu0 %v1184
        %1187 = vmatpush1.msra.mxu0 %v1181
        %1188 = vmatprep.subr.mxu0 0.0
        %1189 = vmatpush1.msra.mxu0 0.0
        %1190 = vmatprep.subr.mxu0 0.0
        %1191 = vmatpush1.msra.mxu0 0.0
        %1192 = vmatprep.subr.mxu0 0.0
        %1193 = vmatpush1.msra.mxu0 0.0
        %1194 = vmatprep.subr.mxu0 0.0
        %1195 = vmatpush1.msra.mxu0 0.0
        %1196 = vmatprep.subr.mxu0 0.0
        %1197 = vmatpush1.msra.mxu0 0.0
        %1198 = vmatprep.subr.mxu0 0.0
        %1199 = vmatpush1.msra.mxu0 0.0
        %1200 = vmatprep.subr.mxu0 0.0
        %1201 = vmatpush1.msra.mxu0 0.0
        %1202 = vmatprep.subr.mxu0 0.0
        %1203 = vmatpush1.msra.mxu0 0.0
        %1204 = vmatprep.subr.mxu0 0.0
        %1205 = vmatpush1.msra.mxu0 0.0
        %1206 = vmatprep.subr.mxu0 0.0
        %1207 = vmatpush1.msra.mxu0 0.0
        %1208 = vmatprep.subr.mxu0 0.0
        %1209 = vmatpush1.msra.mxu0 0.0
        %1210 = vmatprep.subr.mxu0 0.0
        %1211 = vmatpush1.msra.mxu0 0.0
        %1212 = vmatprep.subr.mxu0 0.0
        %1213 = vmatpush1.msra.mxu0 0.0
        %1214 = vmatprep.subr.mxu0 0.0
        %1215 = vmatpush1.msra.mxu0 0.0
        %1216 = vmatprep.subr.mxu0 0.0
        %1217 = vmatpush1.msra.mxu0 0.0
        %1218 = vmatprep.subr.mxu0 0.0
        %1219 = vmatpush1.msra.mxu0 0.0
        %1220 = vmatprep.subr.mxu0 0.0
        %1221 = vmatpush1.msra.mxu0 0.0
        %1222 = vmatprep.subr.mxu0 0.0
        %1223 = vmatpush1.msra.mxu0 0.0
        %1224 = vmatprep.subr.mxu0 0.0
        %1225 = vmatpush1.msra.mxu0 0.0
        %1226 = vmatprep.subr.mxu0 0.0
        %1227 = vmatpush1.msra.mxu0 0.0
        %1228 = vmatprep.subr.mxu0 0.0
        %1229 = vmatpush1.msra.mxu0 0.0
        %1230 = vmatprep.subr.mxu0 0.0
        %1231 = vmatpush1.msra.mxu0 0.0
        %1232 = vmatprep.subr.mxu0 0.0
        %1233 = vmatpush1.msra.mxu0 0.0
        %1234 = vmatprep.subr.mxu0 0.0
        %1235 = vmatpush1.msra.mxu0 0.0
        %1236 = vmatprep.subr.mxu0 0.0
        %1237 = vmatpush1.msra.mxu0 0.0
        %1238 = vmatprep.subr.mxu0 0.0
        %1239 = vmatpush1.msra.mxu0 0.0
        %1240 = vmatprep.subr.mxu0 0.0
        %1241 = vmatpush1.msra.mxu0 0.0
        %1242 = vmatprep.subr.mxu0 0.0
        %1243 = vmatpush1.msra.mxu0 0.0
        %1244 = vmatprep.subr.mxu0 0.0
        %1245 = vmatpush1.msra.mxu0 0.0
        %1246 = vmatprep.subr.mxu0 0.0
        %1247 = vmatpush1.msra.mxu0 0.0
        %1248 = vmatprep.subr.mxu0 0.0
        %1249 = vmatpush1.msra.mxu0 0.0
        %1250 = vmatprep.mubr.f32.mxu0 0.0
        %1251 = vmatmul.mubr.f32.gmra.mrb[0].mxu0 %v1178
        %v1252 = vpop.f32.mrb[0].mxu0
        %v1253 = vadd.f32 0.0, %v1252
        %v1254 = vpop.f32.mrb[0].mxu0
        %v1255 = vadd.f32 0.0, %v1254
        %1256 = vdwg.mxu0
        %v1258 = vsel %vm316, %v1166, 0
        %v1261 = vsel %vm320, %v1164, 0
        %v1264 = vsel %vm320, %v1165, 0
        %1266 = vmatprep.subr.mxu0 %v1264
        %1267 = vmatpush1.msra.mxu0 %v1261
        %1268 = vmatprep.subr.mxu0 0.0
        %1269 = vmatpush1.msra.mxu0 0.0
        %1270 = vmatprep.subr.mxu0 0.0
        %1271 = vmatpush1.msra.mxu0 0.0
        %1272 = vmatprep.subr.mxu0 0.0
        %1273 = vmatpush1.msra.mxu0 0.0
        %1274 = vmatprep.subr.mxu0 0.0
        %1275 = vmatpush1.msra.mxu0 0.0
        %1276 = vmatprep.subr.mxu0 0.0
        %1277 = vmatpush1.msra.mxu0 0.0
        %1278 = vmatprep.subr.mxu0 0.0
        %1279 = vmatpush1.msra.mxu0 0.0
        %1280 = vmatprep.subr.mxu0 0.0
        %1281 = vmatpush1.msra.mxu0 0.0
        %1282 = vmatprep.subr.mxu0 0.0
        %1283 = vmatpush1.msra.mxu0 0.0
        %1284 = vmatprep.subr.mxu0 0.0
        %1285 = vmatpush1.msra.mxu0 0.0
        %1286 = vmatprep.subr.mxu0 0.0
        %1287 = vmatpush1.msra.mxu0 0.0
        %1288 = vmatprep.subr.mxu0 0.0
        %1289 = vmatpush1.msra.mxu0 0.0
        %1290 = vmatprep.subr.mxu0 0.0
        %1291 = vmatpush1.msra.mxu0 0.0
        %1292 = vmatprep.subr.mxu0 0.0
        %1293 = vmatpush1.msra.mxu0 0.0
        %1294 = vmatprep.subr.mxu0 0.0
        %1295 = vmatpush1.msra.mxu0 0.0
        %1296 = vmatprep.subr.mxu0 0.0
        %1297 = vmatpush1.msra.mxu0 0.0
        %1298 = vmatprep.subr.mxu0 0.0
        %1299 = vmatpush1.msra.mxu0 0.0
        %1300 = vmatprep.subr.mxu0 0.0
        %1301 = vmatpush1.msra.mxu0 0.0
        %1302 = vmatprep.subr.mxu0 0.0
        %1303 = vmatpush1.msra.mxu0 0.0
        %1304 = vmatprep.subr.mxu0 0.0
        %1305 = vmatpush1.msra.mxu0 0.0
        %1306 = vmatprep.subr.mxu0 0.0
        %1307 = vmatpush1.msra.mxu0 0.0
        %1308 = vmatprep.subr.mxu0 0.0
        %1309 = vmatpush1.msra.mxu0 0.0
        %1310 = vmatprep.subr.mxu0 0.0
        %1311 = vmatpush1.msra.mxu0 0.0
        %1312 = vmatprep.subr.mxu0 0.0
        %1313 = vmatpush1.msra.mxu0 0.0
        %1314 = vmatprep.subr.mxu0 0.0
        %1315 = vmatpush1.msra.mxu0 0.0
        %1316 = vmatprep.subr.mxu0 0.0
        %1317 = vmatpush1.msra.mxu0 0.0
        %1318 = vmatprep.subr.mxu0 0.0
        %1319 = vmatpush1.msra.mxu0 0.0
        %1320 = vmatprep.subr.mxu0 0.0
        %1321 = vmatpush1.msra.mxu0 0.0
        %1322 = vmatprep.subr.mxu0 0.0
        %1323 = vmatpush1.msra.mxu0 0.0
        %1324 = vmatprep.subr.mxu0 0.0
        %1325 = vmatpush1.msra.mxu0 0.0
        %1326 = vmatprep.subr.mxu0 0.0
        %1327 = vmatpush1.msra.mxu0 0.0
        %1328 = vmatprep.subr.mxu0 0.0
        %1329 = vmatpush1.msra.mxu0 0.0
        %1330 = vmatprep.mubr.f32.mxu0 0.0
        %1331 = vmatmul.mubr.f32.gmra.mrb[0].mxu0 %v1258
        %v1332 = vpop.f32.mrb[0].mxu0
        %v1333 = vadd.f32 %v1253, %v1332
        %v1334 = vpop.f32.mrb[0].mxu0
        %v1335 = vadd.f32 %v1255, %v1334
        %1336 = vdwg.mxu0
        %1337 = vrot.lane.b32.xlu0 %v1156, 15
        %v1338 = vpop.permute.xlu0 %1337
        %1339 = vrot.lane.b32.xlu0 %v1157, 15
        %v1340 = vpop.permute.xlu0 %1339
        %v1341 = vsel %vm482, %v1338, %v1340
        %v1342 = vsel %vm482, %v1340, %v1338
        %v1343 = vmul.f32 %v1342, %v486
        %v1344 = vmul.f32 %v1341, %v488
        %s1345 = scalar_lea.vmem %s4, 16
        %v1346 = vld [vmem:[%s1345] sm:$0xff]
        %v1348 = vsel %vm316, %v1346, 0
        %v1351 = vsel %vm320, %v1343, 0
        %v1354 = vsel %vm320, %v1344, 0
        %1356 = vmatprep.subr.mxu0 %v1354
        %1357 = vmatpush1.msra.mxu0 %v1351
        %1358 = vmatprep.subr.mxu0 0.0
        %1359 = vmatpush1.msra.mxu0 0.0
        %1360 = vmatprep.subr.mxu0 0.0
        %1361 = vmatpush1.msra.mxu0 0.0
        %1362 = vmatprep.subr.mxu0 0.0
        %1363 = vmatpush1.msra.mxu0 0.0
        %1364 = vmatprep.subr.mxu0 0.0
        %1365 = vmatpush1.msra.mxu0 0.0
        %1366 = vmatprep.subr.mxu0 0.0
        %1367 = vmatpush1.msra.mxu0 0.0
        %1368 = vmatprep.subr.mxu0 0.0
        %1369 = vmatpush1.msra.mxu0 0.0
        %1370 = vmatprep.subr.mxu0 0.0
        %1371 = vmatpush1.msra.mxu0 0.0
        %1372 = vmatprep.subr.mxu0 0.0
        %1373 = vmatpush1.msra.mxu0 0.0
        %1374 = vmatprep.subr.mxu0 0.0
        %1375 = vmatpush1.msra.mxu0 0.0
        %1376 = vmatprep.subr.mxu0 0.0
        %1377 = vmatpush1.msra.mxu0 0.0
        %1378 = vmatprep.subr.mxu0 0.0
        %1379 = vmatpush1.msra.mxu0 0.0
        %1380 = vmatprep.subr.mxu0 0.0
        %1381 = vmatpush1.msra.mxu0 0.0
        %1382 = vmatprep.subr.mxu0 0.0
        %1383 = vmatpush1.msra.mxu0 0.0
        %1384 = vmatprep.subr.mxu0 0.0
        %1385 = vmatpush1.msra.mxu0 0.0
        %1386 = vmatprep.subr.mxu0 0.0
        %1387 = vmatpush1.msra.mxu0 0.0
        %1388 = vmatprep.subr.mxu0 0.0
        %1389 = vmatpush1.msra.mxu0 0.0
        %1390 = vmatprep.subr.mxu0 0.0
        %1391 = vmatpush1.msra.mxu0 0.0
        %1392 = vmatprep.subr.mxu0 0.0
        %1393 = vmatpush1.msra.mxu0 0.0
        %1394 = vmatprep.subr.mxu0 0.0
        %1395 = vmatpush1.msra.mxu0 0.0
        %1396 = vmatprep.subr.mxu0 0.0
        %1397 = vmatpush1.msra.mxu0 0.0
        %1398 = vmatprep.subr.mxu0 0.0
        %1399 = vmatpush1.msra.mxu0 0.0
        %1400 = vmatprep.subr.mxu0 0.0
        %1401 = vmatpush1.msra.mxu0 0.0
        %1402 = vmatprep.subr.mxu0 0.0
        %1403 = vmatpush1.msra.mxu0 0.0
        %1404 = vmatprep.subr.mxu0 0.0
        %1405 = vmatpush1.msra.mxu0 0.0
        %1406 = vmatprep.subr.mxu0 0.0
        %1407 = vmatpush1.msra.mxu0 0.0
        %1408 = vmatprep.subr.mxu0 0.0
        %1409 = vmatpush1.msra.mxu0 0.0
        %1410 = vmatprep.subr.mxu0 0.0
        %1411 = vmatpush1.msra.mxu0 0.0
        %1412 = vmatprep.subr.mxu0 0.0
        %1413 = vmatpush1.msra.mxu0 0.0
        %1414 = vmatprep.subr.mxu0 0.0
        %1415 = vmatpush1.msra.mxu0 0.0
        %1416 = vmatprep.subr.mxu0 0.0
        %1417 = vmatpush1.msra.mxu0 0.0
        %1418 = vmatprep.subr.mxu0 0.0
        %1419 = vmatpush1.msra.mxu0 0.0
        %1420 = vmatprep.mubr.f32.mxu0 0.0
        %1421 = vmatmul.mubr.f32.gmra.mrb[0].mxu0 %v1348
        %v1422 = vpop.f32.mrb[0].mxu0
        %v1423 = vadd.f32 0.0, %v1422
        %v1424 = vpop.f32.mrb[0].mxu0
        %v1425 = vadd.f32 0.0, %v1424
        %1426 = vdwg.mxu0
        %v1427 = vadd.f32 %v1333, %v1423
        %v1428 = vadd.f32 %v1335, %v1425
        %1429 = vrot.lane.b32.xlu0 %v1156, 1
        %v1430 = vpop.permute.xlu0 %1429
        %1431 = vrot.lane.b32.xlu0 %v1157, 1
        %v1432 = vpop.permute.xlu0 %1431
        %v1433 = vsel %vm580, %v1430, %v1432
        %v1434 = vsel %vm580, %v1432, %v1430
        %v1435 = vmul.f32 %v1434, %v584
        %v1436 = vmul.f32 %v1433, %v586
        %s1437 = scalar_lea.vmem %s4, 24
        %v1438 = vld [vmem:[%s1437] sm:$0xff]
        %v1440 = vsel %vm316, %v1438, 0
        %v1443 = vsel %vm320, %v1435, 0
        %v1446 = vsel %vm320, %v1436, 0
        %1448 = vmatprep.subr.mxu0 %v1446
        %1449 = vmatpush1.msra.mxu0 %v1443
        %1450 = vmatprep.subr.mxu0 0.0
        %1451 = vmatpush1.msra.mxu0 0.0
        %1452 = vmatprep.subr.mxu0 0.0
        %1453 = vmatpush1.msra.mxu0 0.0
        %1454 = vmatprep.subr.mxu0 0.0
        %1455 = vmatpush1.msra.mxu0 0.0
        %1456 = vmatprep.subr.mxu0 0.0
        %1457 = vmatpush1.msra.mxu0 0.0
        %1458 = vmatprep.subr.mxu0 0.0
        %1459 = vmatpush1.msra.mxu0 0.0
        %1460 = vmatprep.subr.mxu0 0.0
        %1461 = vmatpush1.msra.mxu0 0.0
        %1462 = vmatprep.subr.mxu0 0.0
        %1463 = vmatpush1.msra.mxu0 0.0
        %1464 = vmatprep.subr.mxu0 0.0
        %1465 = vmatpush1.msra.mxu0 0.0
        %1466 = vmatprep.subr.mxu0 0.0
        %1467 = vmatpush1.msra.mxu0 0.0
        %1468 = vmatprep.subr.mxu0 0.0
        %1469 = vmatpush1.msra.mxu0 0.0
        %1470 = vmatprep.subr.mxu0 0.0
        %1471 = vmatpush1.msra.mxu0 0.0
        %1472 = vmatprep.subr.mxu0 0.0
        %1473 = vmatpush1.msra.mxu0 0.0
        %1474 = vmatprep.subr.mxu0 0.0
        %1475 = vmatpush1.msra.mxu0 0.0
        %1476 = vmatprep.subr.mxu0 0.0
        %1477 = vmatpush1.msra.mxu0 0.0
        %1478 = vmatprep.subr.mxu0 0.0
        %1479 = vmatpush1.msra.mxu0 0.0
        %1480 = vmatprep.subr.mxu0 0.0
        %1481 = vmatpush1.msra.mxu0 0.0
        %1482 = vmatprep.subr.mxu0 0.0
        %1483 = vmatpush1.msra.mxu0 0.0
        %1484 = vmatprep.subr.mxu0 0.0
        %1485 = vmatpush1.msra.mxu0 0.0
        %1486 = vmatprep.subr.mxu0 0.0
        %1487 = vmatpush1.msra.mxu0 0.0
        %1488 = vmatprep.subr.mxu0 0.0
        %1489 = vmatpush1.msra.mxu0 0.0
        %1490 = vmatprep.subr.mxu0 0.0
        %1491 = vmatpush1.msra.mxu0 0.0
        %1492 = vmatprep.subr.mxu0 0.0
        %1493 = vmatpush1.msra.mxu0 0.0
        %1494 = vmatprep.subr.mxu0 0.0
        %1495 = vmatpush1.msra.mxu0 0.0
        %1496 = vmatprep.subr.mxu0 0.0
        %1497 = vmatpush1.msra.mxu0 0.0
        %1498 = vmatprep.subr.mxu0 0.0
        %1499 = vmatpush1.msra.mxu0 0.0
        %1500 = vmatprep.subr.mxu0 0.0
        %1501 = vmatpush1.msra.mxu0 0.0
        %1502 = vmatprep.subr.mxu0 0.0
        %1503 = vmatpush1.msra.mxu0 0.0
        %1504 = vmatprep.subr.mxu0 0.0
        %1505 = vmatpush1.msra.mxu0 0.0
        %1506 = vmatprep.subr.mxu0 0.0
        %1507 = vmatpush1.msra.mxu0 0.0
        %1508 = vmatprep.subr.mxu0 0.0
        %1509 = vmatpush1.msra.mxu0 0.0
        %1510 = vmatprep.subr.mxu0 0.0
        %1511 = vmatpush1.msra.mxu0 0.0
        %1512 = vmatprep.mubr.f32.mxu0 0.0
        %1513 = vmatmul.mubr.f32.gmra.mrb[0].mxu0 %v1440
        %v1514 = vpop.f32.mrb[0].mxu0
        %v1515 = vadd.f32 0.0, %v1514
        %v1516 = vpop.f32.mrb[0].mxu0
        %v1517 = vadd.f32 0.0, %v1516
        %1518 = vdwg.mxu0
        %v1519 = vadd.f32 %v1427, %v1515
        %v1520 = vadd.f32 %v1428, %v1517
        %s1521 = scalar_lea.vmem %s4, 32
        %v1522 = vld [vmem:[%s1521] sm:$0xff]
        %v1524 = vsel %vm316, %v1522, 0
        %v1527 = vsel %vm320, %v1156, 0
        %v1530 = vsel %vm320, %v1157, 0
        %1532 = vmatprep.subr.mxu0 %v1530
        %1533 = vmatpush1.msra.mxu0 %v1527
        %1534 = vmatprep.subr.mxu0 0.0
        %1535 = vmatpush1.msra.mxu0 0.0
        %1536 = vmatprep.subr.mxu0 0.0
        %1537 = vmatpush1.msra.mxu0 0.0
        %1538 = vmatprep.subr.mxu0 0.0
        %1539 = vmatpush1.msra.mxu0 0.0
        %1540 = vmatprep.subr.mxu0 0.0
        %1541 = vmatpush1.msra.mxu0 0.0
        %1542 = vmatprep.subr.mxu0 0.0
        %1543 = vmatpush1.msra.mxu0 0.0
        %1544 = vmatprep.subr.mxu0 0.0
        %1545 = vmatpush1.msra.mxu0 0.0
        %1546 = vmatprep.subr.mxu0 0.0
        %1547 = vmatpush1.msra.mxu0 0.0
        %1548 = vmatprep.subr.mxu0 0.0
        %1549 = vmatpush1.msra.mxu0 0.0
        %1550 = vmatprep.subr.mxu0 0.0
        %1551 = vmatpush1.msra.mxu0 0.0
        %1552 = vmatprep.subr.mxu0 0.0
        %1553 = vmatpush1.msra.mxu0 0.0
        %1554 = vmatprep.subr.mxu0 0.0
        %1555 = vmatpush1.msra.mxu0 0.0
        %1556 = vmatprep.subr.mxu0 0.0
        %1557 = vmatpush1.msra.mxu0 0.0
        %1558 = vmatprep.subr.mxu0 0.0
        %1559 = vmatpush1.msra.mxu0 0.0
        %1560 = vmatprep.subr.mxu0 0.0
        %1561 = vmatpush1.msra.mxu0 0.0
        %1562 = vmatprep.subr.mxu0 0.0
        %1563 = vmatpush1.msra.mxu0 0.0
        %1564 = vmatprep.subr.mxu0 0.0
        %1565 = vmatpush1.msra.mxu0 0.0
        %1566 = vmatprep.subr.mxu0 0.0
        %1567 = vmatpush1.msra.mxu0 0.0
        %1568 = vmatprep.subr.mxu0 0.0
        %1569 = vmatpush1.msra.mxu0 0.0
        %1570 = vmatprep.subr.mxu0 0.0
        %1571 = vmatpush1.msra.mxu0 0.0
        %1572 = vmatprep.subr.mxu0 0.0
        %1573 = vmatpush1.msra.mxu0 0.0
        %1574 = vmatprep.subr.mxu0 0.0
        %1575 = vmatpush1.msra.mxu0 0.0
        %1576 = vmatprep.subr.mxu0 0.0
        %1577 = vmatpush1.msra.mxu0 0.0
        %1578 = vmatprep.subr.mxu0 0.0
        %1579 = vmatpush1.msra.mxu0 0.0
        %1580 = vmatprep.subr.mxu0 0.0
        %1581 = vmatpush1.msra.mxu0 0.0
        %1582 = vmatprep.subr.mxu0 0.0
        %1583 = vmatpush1.msra.mxu0 0.0
        %1584 = vmatprep.subr.mxu0 0.0
        %1585 = vmatpush1.msra.mxu0 0.0
        %1586 = vmatprep.subr.mxu0 0.0
        %1587 = vmatpush1.msra.mxu0 0.0
        %1588 = vmatprep.subr.mxu0 0.0
        %1589 = vmatpush1.msra.mxu0 0.0
        %1590 = vmatprep.subr.mxu0 0.0
        %1591 = vmatpush1.msra.mxu0 0.0
        %1592 = vmatprep.subr.mxu0 0.0
        %1593 = vmatpush1.msra.mxu0 0.0
        %1594 = vmatprep.subr.mxu0 0.0
        %1595 = vmatpush1.msra.mxu0 0.0
        %1596 = vmatprep.mubr.f32.mxu0 0.0
        %1597 = vmatmul.mubr.f32.gmra.mrb[0].mxu0 %v1524
        %v1598 = vpop.f32.mrb[0].mxu0
        %v1599 = vadd.f32 0.0, %v1598
        %v1600 = vpop.f32.mrb[0].mxu0
        %v1601 = vadd.f32 0.0, %v1600
        %1602 = vdwg.mxu0
        %v1603 = vadd.f32 %v1519, %v1599
        %v1604 = vadd.f32 %v1520, %v1601
        %1605 = vrot.lane.b32.xlu0 %v1156, 127
        %v1606 = vpop.permute.xlu0 %1605
        %1607 = vrot.lane.b32.xlu0 %v1157, 127
        %v1608 = vpop.permute.xlu0 %1607
        %v1609 = vsel %vm760, %v1606, %v1608
        %v1610 = vsel %vm760, %v1608, %v1606
        %v1611 = vmul.f32 %v1609, %v764
        %v1612 = vmul.f32 %v1610, %v766
        %s1613 = scalar_lea.vmem %s4, 40
        %v1614 = vld [vmem:[%s1613] sm:$0xff]
        %v1616 = vsel %vm316, %v1614, 0
        %v1619 = vsel %vm320, %v1611, 0
        %v1622 = vsel %vm320, %v1612, 0
        %1624 = vmatprep.subr.mxu0 %v1622
        %1625 = vmatpush1.msra.mxu0 %v1619
        %1626 = vmatprep.subr.mxu0 0.0
        %1627 = vmatpush1.msra.mxu0 0.0
        %1628 = vmatprep.subr.mxu0 0.0
        %1629 = vmatpush1.msra.mxu0 0.0
        %1630 = vmatprep.subr.mxu0 0.0
        %1631 = vmatpush1.msra.mxu0 0.0
        %1632 = vmatprep.subr.mxu0 0.0
        %1633 = vmatpush1.msra.mxu0 0.0
        %1634 = vmatprep.subr.mxu0 0.0
        %1635 = vmatpush1.msra.mxu0 0.0
        %1636 = vmatprep.subr.mxu0 0.0
        %1637 = vmatpush1.msra.mxu0 0.0
        %1638 = vmatprep.subr.mxu0 0.0
        %1639 = vmatpush1.msra.mxu0 0.0
        %1640 = vmatprep.subr.mxu0 0.0
        %1641 = vmatpush1.msra.mxu0 0.0
        %1642 = vmatprep.subr.mxu0 0.0
        %1643 = vmatpush1.msra.mxu0 0.0
        %1644 = vmatprep.subr.mxu0 0.0
        %1645 = vmatpush1.msra.mxu0 0.0
        %1646 = vmatprep.subr.mxu0 0.0
        %1647 = vmatpush1.msra.mxu0 0.0
        %1648 = vmatprep.subr.mxu0 0.0
        %1649 = vmatpush1.msra.mxu0 0.0
        %1650 = vmatprep.subr.mxu0 0.0
        %1651 = vmatpush1.msra.mxu0 0.0
        %1652 = vmatprep.subr.mxu0 0.0
        %1653 = vmatpush1.msra.mxu0 0.0
        %1654 = vmatprep.subr.mxu0 0.0
        %1655 = vmatpush1.msra.mxu0 0.0
        %1656 = vmatprep.subr.mxu0 0.0
        %1657 = vmatpush1.msra.mxu0 0.0
        %1658 = vmatprep.subr.mxu0 0.0
        %1659 = vmatpush1.msra.mxu0 0.0
        %1660 = vmatprep.subr.mxu0 0.0
        %1661 = vmatpush1.msra.mxu0 0.0
        %1662 = vmatprep.subr.mxu0 0.0
        %1663 = vmatpush1.msra.mxu0 0.0
        %1664 = vmatprep.subr.mxu0 0.0
        %1665 = vmatpush1.msra.mxu0 0.0
        %1666 = vmatprep.subr.mxu0 0.0
        %1667 = vmatpush1.msra.mxu0 0.0
        %1668 = vmatprep.subr.mxu0 0.0
        %1669 = vmatpush1.msra.mxu0 0.0
        %1670 = vmatprep.subr.mxu0 0.0
        %1671 = vmatpush1.msra.mxu0 0.0
        %1672 = vmatprep.subr.mxu0 0.0
        %1673 = vmatpush1.msra.mxu0 0.0
        %1674 = vmatprep.subr.mxu0 0.0
        %1675 = vmatpush1.msra.mxu0 0.0
        %1676 = vmatprep.subr.mxu0 0.0
        %1677 = vmatpush1.msra.mxu0 0.0
        %1678 = vmatprep.subr.mxu0 0.0
        %1679 = vmatpush1.msra.mxu0 0.0
        %1680 = vmatprep.subr.mxu0 0.0
        %1681 = vmatpush1.msra.mxu0 0.0
        %1682 = vmatprep.subr.mxu0 0.0
        %1683 = vmatpush1.msra.mxu0 0.0
        %1684 = vmatprep.subr.mxu0 0.0
        %1685 = vmatpush1.msra.mxu0 0.0
        %1686 = vmatprep.subr.mxu0 0.0
        %1687 = vmatpush1.msra.mxu0 0.0
        %1688 = vmatprep.mubr.f32.mxu0 0.0
        %1689 = vmatmul.mubr.f32.gmra.mrb[0].mxu0 %v1616
        %v1690 = vpop.f32.mrb[0].mxu0
        %v1691 = vadd.f32 0.0, %v1690
        %v1692 = vpop.f32.mrb[0].mxu0
        %v1693 = vadd.f32 0.0, %v1692
        %1694 = vdwg.mxu0
        %v1695 = vadd.f32 %v1603, %v1691
        %v1696 = vadd.f32 %v1604, %v1693
        %1697 = vrot.lane.b32.xlu0 %v1156, 113
        %v1698 = vpop.permute.xlu0 %1697
        %1699 = vrot.lane.b32.xlu0 %v1157, 113
        %v1700 = vpop.permute.xlu0 %1699
        %v1701 = vsel %vm858, %v1698, %v1700
        %v1702 = vsel %vm858, %v1700, %v1698
        %v1703 = vmul.f32 %v1701, %v862
        %v1704 = vmul.f32 %v1702, %v864
        %s1705 = scalar_lea.vmem %s4, 48
        %v1706 = vld [vmem:[%s1705] sm:$0xff]
        %v1708 = vsel %vm316, %v1706, 0
        %v1711 = vsel %vm320, %v1703, 0
        %v1714 = vsel %vm320, %v1704, 0
        %1716 = vmatprep.subr.mxu0 %v1714
        %1717 = vmatpush1.msra.mxu0 %v1711
        %1718 = vmatprep.subr.mxu0 0.0
        %1719 = vmatpush1.msra.mxu0 0.0
        %1720 = vmatprep.subr.mxu0 0.0
        %1721 = vmatpush1.msra.mxu0 0.0
        %1722 = vmatprep.subr.mxu0 0.0
        %1723 = vmatpush1.msra.mxu0 0.0
        %1724 = vmatprep.subr.mxu0 0.0
        %1725 = vmatpush1.msra.mxu0 0.0
        %1726 = vmatprep.subr.mxu0 0.0
        %1727 = vmatpush1.msra.mxu0 0.0
        %1728 = vmatprep.subr.mxu0 0.0
        %1729 = vmatpush1.msra.mxu0 0.0
        %1730 = vmatprep.subr.mxu0 0.0
        %1731 = vmatpush1.msra.mxu0 0.0
        %1732 = vmatprep.subr.mxu0 0.0
        %1733 = vmatpush1.msra.mxu0 0.0
        %1734 = vmatprep.subr.mxu0 0.0
        %1735 = vmatpush1.msra.mxu0 0.0
        %1736 = vmatprep.subr.mxu0 0.0
        %1737 = vmatpush1.msra.mxu0 0.0
        %1738 = vmatprep.subr.mxu0 0.0
        %1739 = vmatpush1.msra.mxu0 0.0
        %1740 = vmatprep.subr.mxu0 0.0
        %1741 = vmatpush1.msra.mxu0 0.0
        %1742 = vmatprep.subr.mxu0 0.0
        %1743 = vmatpush1.msra.mxu0 0.0
        %1744 = vmatprep.subr.mxu0 0.0
        %1745 = vmatpush1.msra.mxu0 0.0
        %1746 = vmatprep.subr.mxu0 0.0
        %1747 = vmatpush1.msra.mxu0 0.0
        %1748 = vmatprep.subr.mxu0 0.0
        %1749 = vmatpush1.msra.mxu0 0.0
        %1750 = vmatprep.subr.mxu0 0.0
        %1751 = vmatpush1.msra.mxu0 0.0
        %1752 = vmatprep.subr.mxu0 0.0
        %1753 = vmatpush1.msra.mxu0 0.0
        %1754 = vmatprep.subr.mxu0 0.0
        %1755 = vmatpush1.msra.mxu0 0.0
        %1756 = vmatprep.subr.mxu0 0.0
        %1757 = vmatpush1.msra.mxu0 0.0
        %1758 = vmatprep.subr.mxu0 0.0
        %1759 = vmatpush1.msra.mxu0 0.0
        %1760 = vmatprep.subr.mxu0 0.0
        %1761 = vmatpush1.msra.mxu0 0.0
        %1762 = vmatprep.subr.mxu0 0.0
        %1763 = vmatpush1.msra.mxu0 0.0
        %1764 = vmatprep.subr.mxu0 0.0
        %1765 = vmatpush1.msra.mxu0 0.0
        %1766 = vmatprep.subr.mxu0 0.0
        %1767 = vmatpush1.msra.mxu0 0.0
        %1768 = vmatprep.subr.mxu0 0.0
        %1769 = vmatpush1.msra.mxu0 0.0
        %1770 = vmatprep.subr.mxu0 0.0
        %1771 = vmatpush1.msra.mxu0 0.0
        %1772 = vmatprep.subr.mxu0 0.0
        %1773 = vmatpush1.msra.mxu0 0.0
        %1774 = vmatprep.subr.mxu0 0.0
        %1775 = vmatpush1.msra.mxu0 0.0
        %1776 = vmatprep.subr.mxu0 0.0
        %1777 = vmatpush1.msra.mxu0 0.0
        %1778 = vmatprep.subr.mxu0 0.0
        %1779 = vmatpush1.msra.mxu0 0.0
        %1780 = vmatprep.mubr.f32.mxu0 0.0
        %1781 = vmatmul.mubr.f32.gmra.mrb[0].mxu0 %v1708
        %v1782 = vpop.f32.mrb[0].mxu0
        %v1783 = vadd.f32 0.0, %v1782
        %v1784 = vpop.f32.mrb[0].mxu0
        %v1785 = vadd.f32 0.0, %v1784
        %1786 = vdwg.mxu0
        %v1787 = vadd.f32 %v1695, %v1783
        %v1788 = vadd.f32 %v1696, %v1785
        %1789 = vrot.lane.b32.xlu0 %v1156, 112
        %v1790 = vpop.permute.xlu0 %1789
        %1791 = vrot.lane.b32.xlu0 %v1157, 112
        %v1792 = vpop.permute.xlu0 %1791
        %v1793 = vsel %vm956, %v1790, %v1792
        %v1794 = vsel %vm956, %v1792, %v1790
        %v1795 = vmul.f32 %v1793, %v960
        %v1796 = vmul.f32 %v1794, %v962
        %s1797 = scalar_lea.vmem %s4, 56
        %v1798 = vld [vmem:[%s1797] sm:$0xff]
        %v1800 = vsel %vm316, %v1798, 0
        %v1803 = vsel %vm320, %v1795, 0
        %v1806 = vsel %vm320, %v1796, 0
        %1808 = vmatprep.subr.mxu0 %v1806
        %1809 = vmatpush1.msra.mxu0 %v1803
        %1810 = vmatprep.subr.mxu0 0.0
        %1811 = vmatpush1.msra.mxu0 0.0
        %1812 = vmatprep.subr.mxu0 0.0
        %1813 = vmatpush1.msra.mxu0 0.0
        %1814 = vmatprep.subr.mxu0 0.0
        %1815 = vmatpush1.msra.mxu0 0.0
        %1816 = vmatprep.subr.mxu0 0.0
        %1817 = vmatpush1.msra.mxu0 0.0
        %1818 = vmatprep.subr.mxu0 0.0
        %1819 = vmatpush1.msra.mxu0 0.0
        %1820 = vmatprep.subr.mxu0 0.0
        %1821 = vmatpush1.msra.mxu0 0.0
        %1822 = vmatprep.subr.mxu0 0.0
        %1823 = vmatpush1.msra.mxu0 0.0
        %1824 = vmatprep.subr.mxu0 0.0
        %1825 = vmatpush1.msra.mxu0 0.0
        %1826 = vmatprep.subr.mxu0 0.0
        %1827 = vmatpush1.msra.mxu0 0.0
        %1828 = vmatprep.subr.mxu0 0.0
        %1829 = vmatpush1.msra.mxu0 0.0
        %1830 = vmatprep.subr.mxu0 0.0
        %1831 = vmatpush1.msra.mxu0 0.0
        %1832 = vmatprep.subr.mxu0 0.0
        %1833 = vmatpush1.msra.mxu0 0.0
        %1834 = vmatprep.subr.mxu0 0.0
        %1835 = vmatpush1.msra.mxu0 0.0
        %1836 = vmatprep.subr.mxu0 0.0
        %1837 = vmatpush1.msra.mxu0 0.0
        %1838 = vmatprep.subr.mxu0 0.0
        %1839 = vmatpush1.msra.mxu0 0.0
        %1840 = vmatprep.subr.mxu0 0.0
        %1841 = vmatpush1.msra.mxu0 0.0
        %1842 = vmatprep.subr.mxu0 0.0
        %1843 = vmatpush1.msra.mxu0 0.0
        %1844 = vmatprep.subr.mxu0 0.0
        %1845 = vmatpush1.msra.mxu0 0.0
        %1846 = vmatprep.subr.mxu0 0.0
        %1847 = vmatpush1.msra.mxu0 0.0
        %1848 = vmatprep.subr.mxu0 0.0
        %1849 = vmatpush1.msra.mxu0 0.0
        %1850 = vmatprep.subr.mxu0 0.0
        %1851 = vmatpush1.msra.mxu0 0.0
        %1852 = vmatprep.subr.mxu0 0.0
        %1853 = vmatpush1.msra.mxu0 0.0
        %1854 = vmatprep.subr.mxu0 0.0
        %1855 = vmatpush1.msra.mxu0 0.0
        %1856 = vmatprep.subr.mxu0 0.0
        %1857 = vmatpush1.msra.mxu0 0.0
        %1858 = vmatprep.subr.mxu0 0.0
        %1859 = vmatpush1.msra.mxu0 0.0
        %1860 = vmatprep.subr.mxu0 0.0
        %1861 = vmatpush1.msra.mxu0 0.0
        %1862 = vmatprep.subr.mxu0 0.0
        %1863 = vmatpush1.msra.mxu0 0.0
        %1864 = vmatprep.subr.mxu0 0.0
        %1865 = vmatpush1.msra.mxu0 0.0
        %1866 = vmatprep.subr.mxu0 0.0
        %1867 = vmatpush1.msra.mxu0 0.0
        %1868 = vmatprep.subr.mxu0 0.0
        %1869 = vmatpush1.msra.mxu0 0.0
        %1870 = vmatprep.subr.mxu0 0.0
        %1871 = vmatpush1.msra.mxu0 0.0
        %1872 = vmatprep.mubr.f32.mxu0 0.0
        %1873 = vmatmul.mubr.f32.gmra.mrb[0].mxu0 %v1800
        %v1874 = vpop.f32.mrb[0].mxu0
        %v1875 = vadd.f32 0.0, %v1874
        %v1876 = vpop.f32.mrb[0].mxu0
        %v1877 = vadd.f32 0.0, %v1876
        %1878 = vdwg.mxu0
        %v1879 = vadd.f32 %v1787, %v1875
        %v1880 = vadd.f32 %v1788, %v1877
        %1881 = vrot.lane.b32.xlu0 %v1156, 111
        %v1882 = vpop.permute.xlu0 %1881
        %1883 = vrot.lane.b32.xlu0 %v1157, 111
        %v1884 = vpop.permute.xlu0 %1883
        %v1885 = vsel %vm1054, %v1882, %v1884
        %v1886 = vsel %vm1054, %v1884, %v1882
        %v1887 = vmul.f32 %v1885, %v1058
        %v1888 = vmul.f32 %v1886, %v1060
        %s1889 = scalar_lea.vmem %s4, 64
        %v1890 = vld [vmem:[%s1889] sm:$0xff]
        %v1892 = vsel %vm316, %v1890, 0
        %v1895 = vsel %vm320, %v1887, 0
        %v1898 = vsel %vm320, %v1888, 0
        %1900 = vmatprep.subr.mxu0 %v1898
        %1901 = vmatpush1.msra.mxu0 %v1895
        %1902 = vmatprep.subr.mxu0 0.0
        %1903 = vmatpush1.msra.mxu0 0.0
        %1904 = vmatprep.subr.mxu0 0.0
        %1905 = vmatpush1.msra.mxu0 0.0
        %1906 = vmatprep.subr.mxu0 0.0
        %1907 = vmatpush1.msra.mxu0 0.0
        %1908 = vmatprep.subr.mxu0 0.0
        %1909 = vmatpush1.msra.mxu0 0.0
        %1910 = vmatprep.subr.mxu0 0.0
        %1911 = vmatpush1.msra.mxu0 0.0
        %1912 = vmatprep.subr.mxu0 0.0
        %1913 = vmatpush1.msra.mxu0 0.0
        %1914 = vmatprep.subr.mxu0 0.0
        %1915 = vmatpush1.msra.mxu0 0.0
        %1916 = vmatprep.subr.mxu0 0.0
        %1917 = vmatpush1.msra.mxu0 0.0
        %1918 = vmatprep.subr.mxu0 0.0
        %1919 = vmatpush1.msra.mxu0 0.0
        %1920 = vmatprep.subr.mxu0 0.0
        %1921 = vmatpush1.msra.mxu0 0.0
        %1922 = vmatprep.subr.mxu0 0.0
        %1923 = vmatpush1.msra.mxu0 0.0
        %1924 = vmatprep.subr.mxu0 0.0
        %1925 = vmatpush1.msra.mxu0 0.0
        %1926 = vmatprep.subr.mxu0 0.0
        %1927 = vmatpush1.msra.mxu0 0.0
        %1928 = vmatprep.subr.mxu0 0.0
        %1929 = vmatpush1.msra.mxu0 0.0
        %1930 = vmatprep.subr.mxu0 0.0
        %1931 = vmatpush1.msra.mxu0 0.0
        %1932 = vmatprep.subr.mxu0 0.0
        %1933 = vmatpush1.msra.mxu0 0.0
        %1934 = vmatprep.subr.mxu0 0.0
        %1935 = vmatpush1.msra.mxu0 0.0
        %1936 = vmatprep.subr.mxu0 0.0
        %1937 = vmatpush1.msra.mxu0 0.0
        %1938 = vmatprep.subr.mxu0 0.0
        %1939 = vmatpush1.msra.mxu0 0.0
        %1940 = vmatprep.subr.mxu0 0.0
        %1941 = vmatpush1.msra.mxu0 0.0
        %1942 = vmatprep.subr.mxu0 0.0
        %1943 = vmatpush1.msra.mxu0 0.0
        %1944 = vmatprep.subr.mxu0 0.0
        %1945 = vmatpush1.msra.mxu0 0.0
        %1946 = vmatprep.subr.mxu0 0.0
        %1947 = vmatpush1.msra.mxu0 0.0
        %1948 = vmatprep.subr.mxu0 0.0
        %1949 = vmatpush1.msra.mxu0 0.0
        %1950 = vmatprep.subr.mxu0 0.0
        %1951 = vmatpush1.msra.mxu0 0.0
        %1952 = vmatprep.subr.mxu0 0.0
        %1953 = vmatpush1.msra.mxu0 0.0
        %1954 = vmatprep.subr.mxu0 0.0
        %1955 = vmatpush1.msra.mxu0 0.0
        %1956 = vmatprep.subr.mxu0 0.0
        %1957 = vmatpush1.msra.mxu0 0.0
        %1958 = vmatprep.subr.mxu0 0.0
        %1959 = vmatpush1.msra.mxu0 0.0
        %1960 = vmatprep.subr.mxu0 0.0
        %1961 = vmatpush1.msra.mxu0 0.0
        %1962 = vmatprep.subr.mxu0 0.0
        %1963 = vmatpush1.msra.mxu0 0.0
        %1964 = vmatprep.mubr.f32.mxu0 0.0
        %1965 = vmatmul.mubr.f32.gmra.mrb[0].mxu0 %v1892
        %v1966 = vpop.f32.mrb[0].mxu0
        %v1967 = vadd.f32 0.0, %v1966
        %v1968 = vpop.f32.mrb[0].mxu0
        %v1969 = vadd.f32 0.0, %v1968
        %1970 = vdwg.mxu0
        %v1971 = vadd.f32 %v1879, %v1967
        %v1972 = vadd.f32 %v1880, %v1969
        %v1973 = vld [vmem:[%s6] sm:$0xff]
        %v1975 = vsel %vm316, %v1973, 0
        %1977 = vmatprep.subr.mxu0 %v681
        %1978 = vmatpush1.msra.mxu0 %v679
        %1979 = vmatprep.subr.mxu0 0.0
        %1980 = vmatpush1.msra.mxu0 0.0
        %1981 = vmatprep.subr.mxu0 0.0
        %1982 = vmatpush1.msra.mxu0 0.0
        %1983 = vmatprep.subr.mxu0 0.0
        %1984 = vmatpush1.msra.mxu0 0.0
        %1985 = vmatprep.subr.mxu0 0.0
        %1986 = vmatpush1.msra.mxu0 0.0
        %1987 = vmatprep.subr.mxu0 0.0
        %1988 = vmatpush1.msra.mxu0 0.0
        %1989 = vmatprep.subr.mxu0 0.0
        %1990 = vmatpush1.msra.mxu0 0.0
        %1991 = vmatprep.subr.mxu0 0.0
        %1992 = vmatpush1.msra.mxu0 0.0
        %1993 = vmatprep.subr.mxu0 0.0
        %1994 = vmatpush1.msra.mxu0 0.0
        %1995 = vmatprep.subr.mxu0 0.0
        %1996 = vmatpush1.msra.mxu0 0.0
        %1997 = vmatprep.subr.mxu0 0.0
        %1998 = vmatpush1.msra.mxu0 0.0
        %1999 = vmatprep.subr.mxu0 0.0
        %2000 = vmatpush1.msra.mxu0 0.0
        %2001 = vmatprep.subr.mxu0 0.0
        %2002 = vmatpush1.msra.mxu0 0.0
        %2003 = vmatprep.subr.mxu0 0.0
        %2004 = vmatpush1.msra.mxu0 0.0
        %2005 = vmatprep.subr.mxu0 0.0
        %2006 = vmatpush1.msra.mxu0 0.0
        %2007 = vmatprep.subr.mxu0 0.0
        %2008 = vmatpush1.msra.mxu0 0.0
        %2009 = vmatprep.subr.mxu0 0.0
        %2010 = vmatpush1.msra.mxu0 0.0
        %2011 = vmatprep.subr.mxu0 0.0
        %2012 = vmatpush1.msra.mxu0 0.0
        %2013 = vmatprep.subr.mxu0 0.0
        %2014 = vmatpush1.msra.mxu0 0.0
        %2015 = vmatprep.subr.mxu0 0.0
        %2016 = vmatpush1.msra.mxu0 0.0
        %2017 = vmatprep.subr.mxu0 0.0
        %2018 = vmatpush1.msra.mxu0 0.0
        %2019 = vmatprep.subr.mxu0 0.0
        %2020 = vmatpush1.msra.mxu0 0.0
        %2021 = vmatprep.subr.mxu0 0.0
        %2022 = vmatpush1.msra.mxu0 0.0
        %2023 = vmatprep.subr.mxu0 0.0
        %2024 = vmatpush1.msra.mxu0 0.0
        %2025 = vmatprep.subr.mxu0 0.0
        %2026 = vmatpush1.msra.mxu0 0.0
        %2027 = vmatprep.subr.mxu0 0.0
        %2028 = vmatpush1.msra.mxu0 0.0
        %2029 = vmatprep.subr.mxu0 0.0
        %2030 = vmatpush1.msra.mxu0 0.0
        %2031 = vmatprep.subr.mxu0 0.0
        %2032 = vmatpush1.msra.mxu0 0.0
        %2033 = vmatprep.subr.mxu0 0.0
        %2034 = vmatpush1.msra.mxu0 0.0
        %2035 = vmatprep.subr.mxu0 0.0
        %2036 = vmatpush1.msra.mxu0 0.0
        %2037 = vmatprep.subr.mxu0 0.0
        %2038 = vmatpush1.msra.mxu0 0.0
        %2039 = vmatprep.subr.mxu0 0.0
        %2040 = vmatpush1.msra.mxu0 0.0
        %2041 = vmatprep.mubr.f32.mxu0 0.0
        %2042 = vmatmul.mubr.f32.gmra.mrb[0].mxu0 %v1975
        %v2043 = vpop.f32.mrb[0].mxu0
        %v2044 = vadd.f32 0.0, %v2043
        %v2045 = vpop.f32.mrb[0].mxu0
        %v2046 = vadd.f32 0.0, %v2045
        %2047 = vdwg.mxu0
        %v2048 = vadd.f32 %v1971, %v2044
        %v2049 = vadd.f32 %v1972, %v2046
        %v2050 = vld [vmem:[%s5] sm:$0xff]
        %2052 = vset.pattern.permute.xlu0 0
        %2053 = vperm.xlu0 %2052, %v2050
        %v2054 = vpop.permute.xlu0 %2053
        %v2056 = vadd.f32 %v2048, %v2054
        %v2057 = vadd.f32 %v2049, %v2054
        %v2058 = vmax.f32 %v2056, 0.0
        %v2059 = vmax.f32 %v2057, 0.0
        %2060 = vst [vmem:[%s272] sm:$0xff] %v2058
        %2061 = vst [vmem:[%s272 + $0x8] sm:$0xff] %v2059
        %s2062 = sand.u32 %s181, 1
        %s2063 = scalar_lea.sflag [#allocation3], %s2062
        %s2064 = sand.u32 %s181, 1
        %s2065 = smul.addr %s2064, 16
        %s2066 = scalar_lea.vmem [#allocation2], %s2065
        // Predicated region
        $region49: #{tpu_custom_call.1} parent=47 // pred_check
          %p2067 = pneg %p191
        $region50: #{tpu_custom_call.1} parent=47 // pred_check_branch
          %2069 = sbr.rel (%p2067) target = $region52
        $region51: #{tpu_custom_call.1} parent=47 // pred_region
          %s2070 = smul.u32 2, %s21
          %s2072 = ssub.s32 256, 256
          %2073 = vsyncadd %s2063, %s2072
          %s2074 = smul.addr %s2070, 128
          %s2075 = scalar_lea.hbm %s7, %s2074
          %s2077 = sshll.u32 %s2066, 4
          %s2078 = int_to_ptr.vmem [resolvable:$true] %s2077
          %2080 = dma.vmem_to_hbm [thread:$0]  %s2078, 256, %s2075, %s2063
        $region52: #{tpu_custom_call.1} parent=47 // pred_fallthru
          _
      $region48: #{tpu_custom_call.1} parent=5 // pred_fallthru
        _
      %p2081 = scmp.le.s32.totalorder 2, %s16
      // Predicated region
      $region53: #{tpu_custom_call.1} parent=5 // pred_check
        %p2082 = pneg %p2081
      $region54: #{tpu_custom_call.1} parent=5 // pred_check_branch
        %2084 = sbr.rel (%p2082) target = $region56
      $region55: #{tpu_custom_call.1} parent=5 // pred_region
        %s2085 = ssub.s32 %s16, 2
        // Predicated region
        $region57: #{tpu_custom_call.1} parent=55 // pred_check
          %p2086 = pneg %p197
        $region58: #{tpu_custom_call.1} parent=55 // pred_check_branch
          %2088 = sbr.rel (%p2086) target = $region60
        $region59: #{tpu_custom_call.1} parent=55 // pred_region
          %s2089 = sand.u32 %s182, 1
          %s2090 = scalar_lea.sflag [#allocation3], %s2089
          %s2091 = sand.u32 %s182, 1
          %s2092 = smul.addr %s2091, 16
          %s2093 = scalar_lea.vmem [#allocation2], %s2092
          %2094 = dma.done %s2090, 256
        $region60: #{tpu_custom_call.1} parent=55 // pred_fallthru
          _
      $region56: #{tpu_custom_call.1} parent=5 // pred_fallthru
        _
    $region6: #{tpu_custom_call.1} parent=1 // loop_footer
      %s20 = sadd.s32 1, %s16
    $region7: #{tpu_custom_call.1} parent=1 // loop_footer_branch
      %15 = sbr.rel target = $region3
    $region8: #{tpu_custom_call.1} parent=1 // loop_exit
      _
    %2095 = vsyncpa [#allocation3], 1
    %s2096 = scalar_lea.sflag [#allocation3], 1
    %2097 = vsyncpa %s2096, 1

</llo_original>
